<compile_context>
chip_gen: v5e
topology: v5e:2x2
jax: 0.10.0
libtpu: 0.0.40
codegen_flags: <defaults>
</compile_context>

<pallas_src>
import functools

import jax
import jax.numpy as jnp
from jax import lax
from jax.experimental import pallas as pl
from jax.experimental.pallas import tpu as pltpu


_LANES = 128   # packed output lanes: [0,64) even conv columns, [64,128) odd


# ----------------------------- Pallas kernel --------------------------------

def stem_fused_kernel(pat_ref, w_ref, b_ref, o_ref, *, W2, Hpw):
    """Fused conv1+bn1+relu+maxpool for one (branch, image-group) tile.

    pat_ref: (1, 1, Mrows, K) bf16  extended im2col patches, rows ordered
             (conv-row parity rp, image-in-block n, pooled row i, pooled col q)
             with Mrows = 2 * Nb * Hpw, Hpw = Hp * W2, K = 7*9*C.
    w_ref:   (1, K, 128) bf16   BN-folded weights; lanes [0,64) = even conv
             columns, lanes [64,128) = odd conv columns.
    b_ref:   (1, 1, 128) f32    BN bias, duplicated into both lane halves.
    o_ref:   (1, 1, Nb*Hpw, 128) bf16  pooled output rows (n, i, q); only
             lanes [0,64) are meaningful, the rest are sliced off outside.
    """
    pat = pat_ref[0, 0]                                       # (Mrows, K)

    # conv (both column parities at once) + folded BN, f32 MXU accumulation.
    y = jnp.dot(pat, w_ref[0], preferred_element_type=jnp.float32) + b_ref[0]
    # ReLU.  NOTE: the pool below relies on post-ReLU values being >= 0 so
    # that zero fill is equivalent to the -inf padding of the PyTorch maxpool.
    y = jnp.maximum(y, 0.0)

    m_rows = y.shape[0]
    half = m_rows // 2                                        # = Nb * Hpw

    # ---- horizontal 3-tap / stride-2 max: max(even[q], odd[q], odd[q-1]) ----
    # Swap the even/odd lane halves (XLU lane rotate; 64 == -64 mod 128).
    y_sw = pltpu.roll(y, shift=64, axis=1)
    q = jax.lax.broadcasted_iota(jnp.int32, (m_rows, 1), 0) % W2
    # odd value of the previous pooled column (spatial left pad at q == 0).
    prev_odd = jnp.where(q == 0, 0.0, pltpu.roll(y_sw, shift=1, axis=0))
    b = jnp.maximum(jnp.maximum(y, y_sw), prev_odd)           # lanes [0,64) valid

    # ---- vertical 3-tap / stride-2 max over conv rows {2i-1, 2i, 2i+1} ----
    b0 = b[:half]                                             # conv rows 2i
    b1 = b[half:]                                             # conv rows 2i+1
    r = jax.lax.broadcasted_iota(jnp.int32, (half, 1), 0) % Hpw
    # conv row 2i-1 = previous pooled row's odd conv row (top pad at i == 0).
    b1_up = jnp.where(r < W2, 0.0, pltpu.roll(b1, shift=W2, axis=0))
    pooled = jnp.maximum(jnp.maximum(b0, b1), b1_up)

    o_ref[0, 0] = pooled.astype(o_ref.dtype)                  # dense bf16 store


# ----------------------------- kernel wrapper --------------------------------

def _stem_pallas_call(pat, w, bias, *, G, Nb, Hpw, W2, K):
    m_rows = 2 * Nb * Hpw
    kernel = functools.partial(stem_fused_kernel, W2=W2, Hpw=Hpw)
    return pl.pallas_call(
        kernel,
        out_shape=jax.ShapeDtypeStruct((2, G, Nb * Hpw, _LANES), jnp.bfloat16),
        grid_spec=pltpu.PrefetchScalarGridSpec(
            num_scalar_prefetch=0,
            grid=(2, G),                         # (branch, image-group)
            in_specs=[
                pl.BlockSpec((1, 1, m_rows, K), lambda br, g: (br, g, 0, 0)),
                pl.BlockSpec((1, K, _LANES), lambda br, g: (br, 0, 0)),
                pl.BlockSpec((1, 1, _LANES), lambda br, g: (br, 0, 0)),
            ],
            out_specs=pl.BlockSpec((1, 1, Nb * Hpw, _LANES),
                                   lambda br, g: (br, g, 0, 0)),
        ),
        compiler_params=pltpu.CompilerParams(
            dimension_semantics=("parallel", "parallel"),
            vmem_limit_bytes=48 * 1024 * 1024,
        ),
    )(pat, w, bias)


# ------------------------------ host-side glue --------------------------------

def _pack_weights(params, eps=1e-5):
    """Fold eval-mode BN into the conv weight and pack both column parities
    into one (K, 128) bf16 matrix: lanes [0,64) even columns (s = kx),
    lanes [64,128) odd columns (s = kx + 2)."""
    w = params["conv1_w"].astype(jnp.float32)                 # (O, C, 7, 7)
    O, C = w.shape[0], w.shape[1]
    scale = params["bn_gamma"] / jnp.sqrt(params["bn_var"] + eps)
    bias = params["bn_beta"] - params["bn_mean"] * scale
    wt = jnp.transpose(w * scale[:, None, None, None], (2, 3, 1, 0))  # (7,7,C,O)
    wk = jnp.zeros((7, 9, C, _LANES), jnp.float32)
    wk = wk.at[:, 0:7, :, 0:O].set(wt)                        # even conv columns
    wk = wk.at[:, 2:9, :, 64:64 + O].set(wt)                  # odd conv columns
    wk = wk.reshape(7 * 9 * C, _LANES).astype(jnp.bfloat16)
    b128 = (jnp.zeros((_LANES,), jnp.float32)
            .at[0:O].set(bias).at[64:64 + O].set(bias))
    return wk, b128.reshape(1, _LANES)                        # bias stays f32


def _build_patches(xp, G, Nb, Hp, W2):
    """xp: (2, N, H+6, W+6, C) bf16 padded input ->
    (2, G, 2*Nb*Hp*W2, 7*9*C) extended im2col patches, tile rows ordered
    (conv-row parity, image-in-block, pooled row, pooled col)."""
    two, N, Hpad, Wpad, C = xp.shape
    Ho = 2 * Hp
    cols = []
    for ky in range(7):
        for s in range(9):                                    # 9 shared kx taps
            cols.append(xp[:, :, ky:ky + 2 * Ho:2,
                           s:s + 4 * W2 - 3:4, :])            # (2,N,Ho,W2,C)
    pat = jnp.stack(cols, axis=4)                             # (2,N,Ho,W2,63,C)
    pat = pat.reshape(two, G, Nb, Hp, 2, W2, 63 * C)
    pat = jnp.transpose(pat, (0, 1, 4, 2, 3, 5, 6))           # (2,G,rp,Nb,Hp,W2,K)
    return pat.reshape(two, G, 2 * Nb * Hp * W2, 63 * C)


def resnet_stem_pair(x_clic, x_derm, params_cli, params_derm):
    """conv1 -> bn1 (eval) -> relu -> maxpool for both modalities (NCHW in/out)."""
    N, C, H, W = x_clic.shape
    assert x_derm.shape == x_clic.shape
    assert H % 4 == 0 and W % 32 == 0, "fused stem assumes H % 4 == 0, W % 32 == 0"
    O = params_cli["conv1_w"].shape[0]
    Ho, Wo = H // 2, W // 2
    Hp, W2 = Ho // 2, Wo // 2            # pooled height / width
    Hpw = Hp * W2
    K = 7 * 9 * C

    x = jnp.stack([x_clic, x_derm], axis=0)                   # (2, N, C, H, W)
    x = jnp.transpose(x, (0, 1, 3, 4, 2))                     # (2, N, H, W, C)
    xp = jnp.pad(x, ((0, 0), (0, 0), (3, 3), (3, 3), (0, 0))).astype(jnp.bfloat16)

    # Several images per grid step at small sizes (amortize per-step overhead).
    per_img_bytes = 2 * Hpw * K * 2
    Nb = 1
    for cand in range(1, N + 1):
        if N % cand == 0 and cand * per_img_bytes <= 2 * 1024 * 1024:
            Nb = cand
    G = N // Nb

    pat = _build_patches(xp, G, Nb, Hp, W2)                   # (2, G, Mrows, K)

    w_c, b_c = _pack_weights(params_cli)
    w_d, b_d = _pack_weights(params_derm)
    w = jnp.stack([w_c, w_d], axis=0)                         # (2, K, 128) bf16
    bias = jnp.stack([b_c, b_d], axis=0)                      # (2, 1, 128) f32

    out = _stem_pallas_call(pat, w, bias, G=G, Nb=Nb, Hpw=Hpw, W2=W2, K=K)
    out = out.reshape(2, N, Hp, W2, _LANES)[..., :O]          # drop packed lanes
    # TODO(synk): a following Pallas layer1 kernel should consume the padded
    # NHWC bf16 layout directly; this transpose only matches the PyTorch API.
    out = jnp.transpose(out, (0, 1, 4, 2, 3))                 # (2, N, O, Hp, Wp)
    return out[0], out[1]


def fusionnet_client_first_forward(x, params_cli, params_derm):
    """architecture_choice = 1/3: stem applied to each modality independently."""
    x_clic, x_derm = x
    return resnet_stem_pair(x_clic, x_derm, params_cli, params_derm)


def init_branch_params(key):
    k1, k2, k3, k4, k5 = jax.random.split(key, 5)
    return {
        "conv1_w": jax.random.normal(k1, (64, 3, 7, 7), jnp.float32) * 0.05,
        "bn_gamma": 1.0 + 0.1 * jax.random.normal(k2, (64,), jnp.float32),
        "bn_beta": 0.1 * jax.random.normal(k3, (64,), jnp.float32),
        "bn_mean": 0.1 * jax.random.normal(k4, (64,), jnp.float32),
        "bn_var": jax.nn.softplus(jax.random.normal(k5, (64,), jnp.float32)) + 0.5,
    }


# ------------------------------ reference (pure JAX) --------------------------

def resnet_stem_ref(x_nchw, params):
    eps = 1e-5
    y = lax.conv_general_dilated(
        x_nchw, params["conv1_w"], window_strides=(2, 2),
        padding=((3, 3), (3, 3)),
        dimension_numbers=("NCHW", "OIHW", "NCHW"))
    scale = params["bn_gamma"] / jnp.sqrt(params["bn_var"] + eps)
    bias = params["bn_beta"] - params["bn_mean"] * scale
    y = y * scale[None, :, None, None] + bias[None, :, None, None]
    y = jnp.maximum(y, 0.0)
    y = lax.reduce_window(y, -jnp.inf, lax.max,
                          window_dimensions=(1, 1, 3, 3),
                          window_strides=(1, 1, 2, 2),
                          padding=((0, 0), (0, 0), (1, 1), (1, 1)))
    return y


# ----------------------------------- main -------------------------------------

if __name__ == "__main__":
    key = jax.random.PRNGKey(0)
    kc, kd = jax.random.split(key)
    # clinic and dermoscopy images: NCHW, 3 channels (small spatial for demo)
    x_clic = jax.random.normal(kc, (2, 3, 32, 32), jnp.float32)
    x_derm = jax.random.normal(kd, (2, 3, 32, 32), jnp.float32)

    pk_cli, pk_derm = jax.random.split(jax.random.PRNGKey(42))
    params_cli = init_branch_params(pk_cli)
    params_derm = init_branch_params(pk_derm)

    fwd = jax.jit(lambda xc, xd: fusionnet_client_first_forward(
        (xc, xd), params_cli, params_derm))
    out_clic, out_derm = fwd(x_clic, x_derm)
    jax.block_until_ready((out_clic, out_derm))

    assert out_clic.shape == (2, 64, 8, 8), out_clic.shape
    assert out_derm.shape == (2, 64, 8, 8), out_derm.shape

    # correctness check vs. pure-JAX f32 reference; the kernel uses bf16 conv
    # operands / bf16 output with f32 accumulation, hence the loose tolerance.
    ref_clic = resnet_stem_ref(x_clic, params_cli)
    ref_derm = resnet_stem_ref(x_derm, params_derm)
    assert jnp.allclose(out_clic.astype(jnp.float32), ref_clic,
                        rtol=2e-2, atol=2e-2)
    assert jnp.allclose(out_derm.astype(jnp.float32), ref_derm,
                        rtol=2e-2, atol=2e-2)

    print("KERNEL_OK")
</pallas_src>

<mosaic_0001>
module attributes {stable_mosaic.version = 11 : i64} {
  func.func @stem_fused_kernel(%arg0: i32, %arg1: i32, %arg2: memref<1x1x256x189xbf16, #tpu.memory_space<vmem>>, %arg3: memref<1x189x128xbf16, #tpu.memory_space<vmem>>, %arg4: memref<1x1x128xf32, #tpu.memory_space<vmem>>, %arg5: memref<1x1x128x128xbf16, #tpu.memory_space<vmem>>) attributes {dimension_semantics = [#tpu.dimension_semantics<parallel>, #tpu.dimension_semantics<parallel>], iteration_bounds = array<i64: 2, 1>, scalar_prefetch = 0 : i64, scratch_operands = 0 : i64, tpu.core_type = #tpu.core_type<tc>, window_params = [{transform_indices = @transform_0, window_bounds = array<i64: 1, 1, 256, 189>}, {transform_indices = @transform_1, window_bounds = array<i64: 1, 189, 128>}, {transform_indices = @transform_2, window_bounds = array<i64: 1, 1, 128>}, {transform_indices = @transform_3, window_bounds = array<i64: 1, 1, 128, 128>}]} {
    %c0 = arith.constant 0 : index
    %c0_0 = arith.constant 0 : index
    %c0_1 = arith.constant 0 : index
    %c0_2 = arith.constant 0 : index
    %0 = vector.load %arg2[%c0, %c0_0, %c0_1, %c0_2] : memref<1x1x256x189xbf16, #tpu.memory_space<vmem>>, vector<1x1x256x189xbf16>
    %1 = vector.shape_cast %0 : vector<1x1x256x189xbf16> to vector<256x189xbf16>
    %c0_3 = arith.constant 0 : index
    %c0_4 = arith.constant 0 : index
    %c0_5 = arith.constant 0 : index
    %2 = vector.load %arg3[%c0_3, %c0_4, %c0_5] : memref<1x189x128xbf16, #tpu.memory_space<vmem>>, vector<1x189x128xbf16>
    %3 = vector.shape_cast %2 : vector<1x189x128xbf16> to vector<189x128xbf16>
    %cst = arith.constant dense<0.000000e+00> : vector<256x128xf32>
    %4 = tpu.matmul %1, %3, %cst {dimension_numbers = #tpu.dot_dimension_numbers<[1], [0], [0], [1], [0, 0, 1, 1], [], []>} : vector<256x189xbf16>, vector<189x128xbf16>, vector<256x128xf32> -> vector<256x128xf32>
    %c0_6 = arith.constant 0 : index
    %c0_7 = arith.constant 0 : index
    %c0_8 = arith.constant 0 : index
    %5 = vector.load %arg4[%c0_6, %c0_7, %c0_8] : memref<1x1x128xf32, #tpu.memory_space<vmem>>, vector<1x1x128xf32>
    %6 = vector.shape_cast %5 : vector<1x1x128xf32> to vector<1x128xf32>
    %7 = vector.broadcast %6 : vector<1x128xf32> to vector<256x128xf32>
    %8 = arith.addf %4, %7 : vector<256x128xf32>
    %cst_9 = arith.constant 0.000000e+00 : f32
    %9 = vector.broadcast %cst_9 : f32 to vector<256x128xf32>
    %10 = arith.maximumf %8, %9 : vector<256x128xf32>
    %c64_i32 = arith.constant 64 : i32
    %11 = tpu.dynamic_rotate %10 by %c64_i32 dim 1 : vector<256x128xf32>, i32 -> vector<256x128xf32>
    %12 = tpu.iota {dimensions = array<i32: 0>} : vector<256x1xi32>
    %c8_i32 = arith.constant 8 : i32
    %c0_i32 = arith.constant 0 : i32
    %13 = arith.cmpi eq, %c8_i32, %c0_i32 : i32
    %c1_i32 = arith.constant 1 : i32
    %14 = arith.select %13, %c1_i32, %c8_i32 : i32
    %15 = vector.broadcast %14 : i32 to vector<256x1xi32>
    %16 = arith.remsi %12, %15 : vector<256x1xi32>
    %c0_i32_10 = arith.constant 0 : i32
    %17 = vector.broadcast %c0_i32_10 : i32 to vector<256x1xi32>
    %18 = arith.cmpi ne, %16, %17 : vector<256x1xi32>
    %c0_i32_11 = arith.constant 0 : i32
    %19 = vector.broadcast %c0_i32_11 : i32 to vector<256x1xi32>
    %20 = arith.cmpi slt, %16, %19 : vector<256x1xi32>
    %c0_i32_12 = arith.constant 0 : i32
    %21 = arith.cmpi slt, %14, %c0_i32_12 : i32
    %22 = vector.broadcast %21 : i1 to vector<256x1xi1>
    %23 = vector.broadcast %22 : vector<256x1xi1> to vector<256x1xi1>
    %24 = arith.xori %20, %23 : vector<256x1xi1>
    %25 = arith.andi %24, %18 : vector<256x1xi1>
    %26 = vector.broadcast %14 : i32 to vector<256x1xi32>
    %27 = arith.addi %16, %26 : vector<256x1xi32>
    %28 = arith.select %25, %27, %16 : vector<256x1xi1>, vector<256x1xi32>
    %c0_i32_13 = arith.constant 0 : i32
    %29 = vector.broadcast %c0_i32_13 : i32 to vector<256x1xi32>
    %30 = arith.cmpi eq, %28, %29 : vector<256x1xi32>
    %c1_i32_14 = arith.constant 1 : i32
    %31 = tpu.dynamic_rotate %11 by %c1_i32_14 dim 0 : vector<256x128xf32>, i32 -> vector<256x128xf32>
    %cst_15 = arith.constant 0.000000e+00 : f32
    %32 = vector.shape_cast %30 : vector<256x1xi1> to vector<256x1xi1>
    %33 = vector.broadcast %32 : vector<256x1xi1> to vector<256x128xi1>
    %34 = vector.broadcast %cst_15 : f32 to vector<256x128xf32>
    %35 = arith.select %33, %34, %31 : vector<256x128xi1>, vector<256x128xf32>
    %36 = arith.maximumf %10, %11 : vector<256x128xf32>
    %37 = arith.maximumf %36, %35 : vector<256x128xf32>
    %38 = vector.extract_strided_slice %37 {offsets = [0, 0], sizes = [128, 128], strides = [1, 1]} : vector<256x128xf32> to vector<128x128xf32>
    %39 = vector.extract_strided_slice %37 {offsets = [128, 0], sizes = [128, 128], strides = [1, 1]} : vector<256x128xf32> to vector<128x128xf32>
    %40 = tpu.iota {dimensions = array<i32: 0>} : vector<128x1xi32>
    %c64_i32_16 = arith.constant 64 : i32
    %c0_i32_17 = arith.constant 0 : i32
    %41 = arith.cmpi eq, %c64_i32_16, %c0_i32_17 : i32
    %c1_i32_18 = arith.constant 1 : i32
    %42 = arith.select %41, %c1_i32_18, %c64_i32_16 : i32
    %43 = vector.broadcast %42 : i32 to vector<128x1xi32>
    %44 = arith.remsi %40, %43 : vector<128x1xi32>
    %c0_i32_19 = arith.constant 0 : i32
    %45 = vector.broadcast %c0_i32_19 : i32 to vector<128x1xi32>
    %46 = arith.cmpi ne, %44, %45 : vector<128x1xi32>
    %c0_i32_20 = arith.constant 0 : i32
    %47 = vector.broadcast %c0_i32_20 : i32 to vector<128x1xi32>
    %48 = arith.cmpi slt, %44, %47 : vector<128x1xi32>
    %c0_i32_21 = arith.constant 0 : i32
    %49 = arith.cmpi slt, %42, %c0_i32_21 : i32
    %50 = vector.broadcast %49 : i1 to vector<128x1xi1>
    %51 = vector.broadcast %50 : vector<128x1xi1> to vector<128x1xi1>
    %52 = arith.xori %48, %51 : vector<128x1xi1>
    %53 = arith.andi %52, %46 : vector<128x1xi1>
    %54 = vector.broadcast %42 : i32 to vector<128x1xi32>
    %55 = arith.addi %44, %54 : vector<128x1xi32>
    %56 = arith.select %53, %55, %44 : vector<128x1xi1>, vector<128x1xi32>
    %c8_i32_22 = arith.constant 8 : i32
    %57 = vector.broadcast %c8_i32_22 : i32 to vector<128x1xi32>
    %58 = arith.cmpi slt, %56, %57 : vector<128x1xi32>
    %c8_i32_23 = arith.constant 8 : i32
    %59 = tpu.dynamic_rotate %39 by %c8_i32_23 dim 0 : vector<128x128xf32>, i32 -> vector<128x128xf32>
    %cst_24 = arith.constant 0.000000e+00 : f32
    %60 = vector.shape_cast %58 : vector<128x1xi1> to vector<128x1xi1>
    %61 = vector.broadcast %60 : vector<128x1xi1> to vector<128x128xi1>
    %62 = vector.broadcast %cst_24 : f32 to vector<128x128xf32>
    %63 = arith.select %61, %62, %59 : vector<128x128xi1>, vector<128x128xf32>
    %64 = arith.maximumf %38, %39 : vector<128x128xf32>
    %65 = arith.maximumf %64, %63 : vector<128x128xf32>
    %66 = arith.truncf %65 : vector<128x128xf32> to vector<128x128xbf16>
    %c0_25 = arith.constant 0 : index
    %c0_26 = arith.constant 0 : index
    %c0_27 = arith.constant 0 : index
    %c0_28 = arith.constant 0 : index
    %67 = vector.load %arg5[%c0_25, %c0_26, %c0_27, %c0_28] : memref<1x1x128x128xbf16, #tpu.memory_space<vmem>>, vector<1x1x128x128xbf16>
    %68 = vector.shape_cast %67 : vector<1x1x128x128xbf16> to vector<128x128xbf16>
    %69 = vector.shape_cast %66 : vector<128x128xbf16> to vector<1x1x128x128xbf16>
    tpu.vector_store %arg5[%c0_25, %c0_26, %c0_27, %c0_28], %69 {strides = array<i32>} : memref<1x1x128x128xbf16, #tpu.memory_space<vmem>>, vector<1x1x128x128xbf16>,
    return
  }
  func.func @transform_0(%arg0: i32, %arg1: i32) -> (i32, i32, i32, i32) {
    %c0_i32 = arith.constant 0 : i32
    %c0_i32_0 = arith.constant 0 : i32
    %c0_i32_1 = arith.constant 0 : i32
    return %arg0, %arg1, %c0_i32, %c0_i32_0 : i32, i32, i32, i32
  }
  func.func @transform_1(%arg0: i32, %arg1: i32) -> (i32, i32, i32) {
    %c0_i32 = arith.constant 0 : i32
    %c0_i32_0 = arith.constant 0 : i32
    %c0_i32_1 = arith.constant 0 : i32
    return %arg0, %c0_i32, %c0_i32_0 : i32, i32, i32
  }
  func.func @transform_2(%arg0: i32, %arg1: i32) -> (i32, i32, i32) {
    %c0_i32 = arith.constant 0 : i32
    %c0_i32_0 = arith.constant 0 : i32
    %c0_i32_1 = arith.constant 0 : i32
    return %arg0, %c0_i32, %c0_i32_0 : i32, i32, i32
  }
  func.func @transform_3(%arg0: i32, %arg1: i32) -> (i32, i32, i32, i32) {
    %c0_i32 = arith.constant 0 : i32
    %c0_i32_0 = arith.constant 0 : i32
    %c0_i32_1 = arith.constant 0 : i32
    return %arg0, %arg1, %c0_i32, %c0_i32_0 : i32, i32, i32, i32
  }
}

</mosaic_0001>

<llo_original>
// kernel: _lambda_.1
$region0: #{_lambda_.1}
  #allocation0 [shape = 'u32[]', space=smem, size = 0x4, offset = 0x4, fixed_abs, tag = 'smem constant byte address 0x4 - core index']
  #allocation1 [shape = 'u32[72,128]{1,0:T(1,128)}', space=vmem, size = 0x9000, scoped, tag = 'internal scratch']
  %s0 = inlined_call_operand.vmem [shape: bf16[2,1,256,189], index: 0, kind: input, shape index: {}]
  %s1 = inlined_call_operand.vmem [shape: bf16[2,189,128], index: 1, kind: input, shape index: {}]
  %s2 = inlined_call_operand.vmem [shape: f32[2,1,128], index: 2, kind: input, shape index: {}]
  %s3 = inlined_call_operand.vmem [shape: bf16[2,1,128,128], index: 3, kind: output, shape index: {}]
  %s4 = sld [smem:[#allocation0]]
  $region45: #{_lambda_.1} parent=0
    _
  %s6 = ssub.s32 1, %s4
  %s7 = scalar_select 0, %s6, %s4
  loop: start=0, step=1, limit=4
  $region2: #{_lambda_.1} parent=0 // loop_pre_header
    _
  $region3: #{_lambda_.1} parent=0 // loop_header
    %s9 = sphi 0, %s13
    %p10 = scmp.ge.s32.totalorder %s9, 4
    %s16 = sphi 0, %s28
    %s17 = sphi 0, %s24
    %s18 = sphi 0, %s16
    %s19 = sphi 0, %s17
    %s20 = sphi 0, %s18
    %s21 = sphi 0, %s19
    %s33 = sphi 0, %s35
    %s36 = sphi 0, %s33
    %s37 = sphi 0, %s36
    %s53 = sphi 0, %s37
    %s59 = sphi 0, %s61
    %s62 = sphi 0, %s59
    %s63 = sphi 0, %s62
    %s79 = sphi 0, %s63
    %s85 = sphi 0, %s87
    %s88 = sphi 0, %s85
    %s89 = sphi 0, %s88
    %s105 = sphi 0, %s89
    %s113 = sphi 0, %s115
    %s116 = sphi 0, %s113
    %s117 = sphi 0, %s116
    %s133 = sphi 0, %s117
  $region4: #{_lambda_.1} parent=0 // loop_header_branch
    %12 = sbr.rel (%p10) target = $region8
  $region5: #{_lambda_.1} parent=0 // loop_body
    %s14 = ssub.s32 %s9, 1
    %s15 = ssub.s32 %s9, 2
    %s22 = sadd.s32 1, %s17
    %p23 = scmp.ge.s32.totalorder %s22, 1
    %s24 = scalar_select %p23, 0, %s22
    %s25 = sadd.s32 1, %s16
    %s26 = scalar_select %p23, %s25, %s16
    %p27 = scmp.ge.s32.totalorder %s26, 2
    %s28 = scalar_select %p27, 0, %s26
    %s29 = ssub.s32 %s16, %s28
    %s30 = ssub.s32 %s17, %s24
    %s31 = sor.u32 %s29, %s30
    %p32 = scmp.eq.s32.totalorder %s31, 0
    %s34 = sadd.s32 %s33, 1
    %s35 = scalar_select %p32, %s33, %s34
    %p38 = pneg %p32
    %p39 = scmp.eq.s32.totalorder %s9, 1
    %p40 = por %p38, %p39
    %p41 = scmp.ne.s32.totalorder %s33, %s36
    %p42 = scmp.eq.s32.totalorder %s9, 0
    %p43 = por %p41, %p42
    %p44 = scmp.ne.s32.totalorder %s33, %s36
    %p45 = scmp.eq.s32.totalorder %s14, 1
    %p46 = por %p44, %p45
    %p47 = scmp.ne.s32.totalorder %s36, %s37
    %p48 = scmp.eq.s32.totalorder %s14, 0
    %p49 = por %p47, %p48
    %p50 = scmp.ne.s32.totalorder %s36, %s37
    %p51 = scmp.eq.s32.totalorder %s15, 1
    %p52 = por %p50, %p51
    %p54 = scmp.ne.s32.totalorder %s37, %s53
    %p55 = scmp.eq.s32.totalorder %s15, 0
    %p56 = por %p54, %p55
    %s57 = ssub.s32 %s16, %s28
    %p58 = scmp.eq.s32.totalorder %s57, 0
    %s60 = sadd.s32 %s59, 1
    %s61 = scalar_select %p58, %s59, %s60
    %p64 = pneg %p58
    %p65 = scmp.eq.s32.totalorder %s9, 1
    %p66 = por %p64, %p65
    %p67 = scmp.ne.s32.totalorder %s59, %s62
    %p68 = scmp.eq.s32.totalorder %s9, 0
    %p69 = por %p67, %p68
    %p70 = scmp.ne.s32.totalorder %s59, %s62
    %p71 = scmp.eq.s32.totalorder %s14, 1
    %p72 = por %p70, %p71
    %p73 = scmp.ne.s32.totalorder %s62, %s63
    %p74 = scmp.eq.s32.totalorder %s14, 0
    %p75 = por %p73, %p74
    %p76 = scmp.ne.s32.totalorder %s62, %s63
    %p77 = scmp.eq.s32.totalorder %s15, 1
    %p78 = por %p76, %p77
    %p80 = scmp.ne.s32.totalorder %s63, %s79
    %p81 = scmp.eq.s32.totalorder %s15, 0
    %p82 = por %p80, %p81
    %s83 = ssub.s32 %s16, %s28
    %p84 = scmp.eq.s32.totalorder %s83, 0
    %s86 = sadd.s32 %s85, 1
    %s87 = scalar_select %p84, %s85, %s86
    %p90 = pneg %p84
    %p91 = scmp.eq.s32.totalorder %s9, 1
    %p92 = por %p90, %p91
    %p93 = scmp.ne.s32.totalorder %s85, %s88
    %p94 = scmp.eq.s32.totalorder %s9, 0
    %p95 = por %p93, %p94
    %p96 = scmp.ne.s32.totalorder %s85, %s88
    %p97 = scmp.eq.s32.totalorder %s14, 1
    %p98 = por %p96, %p97
    %p99 = scmp.ne.s32.totalorder %s88, %s89
    %p100 = scmp.eq.s32.totalorder %s14, 0
    %p101 = por %p99, %p100
    %p102 = scmp.ne.s32.totalorder %s88, %s89
    %p103 = scmp.eq.s32.totalorder %s15, 1
    %p104 = por %p102, %p103
    %p106 = scmp.ne.s32.totalorder %s89, %s105
    %p107 = scmp.eq.s32.totalorder %s15, 0
    %p108 = por %p106, %p107
    %s109 = ssub.s32 %s16, %s28
    %s110 = ssub.s32 %s17, %s24
    %s111 = sor.u32 %s109, %s110
    %p112 = scmp.eq.s32.totalorder %s111, 0
    %s114 = sadd.s32 %s113, 1
    %s115 = scalar_select %p112, %s113, %s114
    %p118 = pneg %p112
    %p119 = scmp.eq.s32.totalorder %s9, 1
    %p120 = por %p118, %p119
    %p121 = scmp.ne.s32.totalorder %s113, %s116
    %p122 = scmp.eq.s32.totalorder %s9, 0
    %p123 = por %p121, %p122
    %p124 = scmp.ne.s32.totalorder %s113, %s116
    %p125 = scmp.eq.s32.totalorder %s14, 1
    %p126 = por %p124, %p125
    %p127 = scmp.ne.s32.totalorder %s116, %s117
    %p128 = scmp.eq.s32.totalorder %s14, 0
    %p129 = por %p127, %p128
    %p130 = scmp.ne.s32.totalorder %s116, %s117
    %p131 = scmp.eq.s32.totalorder %s15, 1
    %p132 = por %p130, %p131
    %p134 = scmp.ne.s32.totalorder %s117, %s133
    %p135 = scmp.eq.s32.totalorder %s15, 0
    %p136 = por %p134, %p135
    %p137 = scmp.le.s32.totalorder 1, %s9
    %p138 = scmp.lt.s32.totalorder %s9, 3
    %p139 = pnand %p137, %p138
    %p140 = pneg %p139
    // Predicated region
    $region9: #{_lambda_.1} parent=5 // pred_check
      _
    $region10: #{_lambda_.1} parent=5 // pred_check_branch
      %142 = sbr.rel (%p139) target = $region12
    $region11: #{_lambda_.1} parent=5 // pred_region
      %s143 = ssub.s32 %s9, 1
    $region12: #{_lambda_.1} parent=5 // pred_fallthru
      _
    %p144 = scmp.lt.s32.totalorder %s9, 2
    // Predicated region
    $region13: #{_lambda_.1} parent=5 // pred_check
      %p145 = pneg %p144
    $region14: #{_lambda_.1} parent=5 // pred_check_branch
      %147 = sbr.rel (%p145) target = $region16
    $region15: #{_lambda_.1} parent=5 // pred_region
      // Predicated region
      $region17: #{_lambda_.1} parent=15 // pred_check
        %p148 = pneg %p43
      $region18: #{_lambda_.1} parent=15 // pred_check_branch
        %150 = sbr.rel (%p148) target = $region20
      $region19: #{_lambda_.1} parent=15 // pred_region
        %p151 = scmp.lt.s32.totalorder %s16, 1
        %s152 = scalar_select %p151, %s16, 1
        %p153 = scmp.lt.s32.totalorder %s17, 0
        %s154 = scalar_select %p153, %s17, 0
        %s155 = smul.addr %s154, 64
        %s156 = smul.addr %s152, 64
        %s157 = sadd.s32 %s155, %s156
        %s158 = smul.addr %s157, 4
        %s159 = scalar_lea.vmem %s0, %s158
      $region20: #{_lambda_.1} parent=15 // pred_fallthru
        _
      // Predicated region
      $region21: #{_lambda_.1} parent=15 // pred_check
        %p160 = pneg %p69
      $region22: #{_lambda_.1} parent=15 // pred_check_branch
        %162 = sbr.rel (%p160) target = $region24
      $region23: #{_lambda_.1} parent=15 // pred_region
        %p163 = scmp.lt.s32.totalorder %s16, 1
        %s164 = scalar_select %p163, %s16, 1
        %s165 = smul.addr %s164, 24
        %s166 = smul.addr %s165, 4
        %s167 = scalar_lea.vmem %s1, %s166
      $region24: #{_lambda_.1} parent=15 // pred_fallthru
        _
      // Predicated region
      $region25: #{_lambda_.1} parent=15 // pred_check
        %p168 = pneg %p95
      $region26: #{_lambda_.1} parent=15 // pred_check_branch
        %170 = sbr.rel (%p168) target = $region28
      $region27: #{_lambda_.1} parent=15 // pred_region
        %p171 = scmp.lt.s32.totalorder %s16, 1
        %s172 = scalar_select %p171, %s16, 1
        %s173 = scalar_lea.vmem %s2, %s172
      $region28: #{_lambda_.1} parent=15 // pred_fallthru
        _
    $region16: #{_lambda_.1} parent=5 // pred_fallthru
      _
    %p174 = scmp.le.s32.totalorder 1, %s9
    %p175 = scmp.lt.s32.totalorder %s9, 3
    %p176 = pnand %p174, %p175
    %p177 = pneg %p176
    // Predicated region
    $region29: #{_lambda_.1} parent=5 // pred_check
      _
    $region30: #{_lambda_.1} parent=5 // pred_check_branch
      %179 = sbr.rel (%p176) target = $region32
    $region31: #{_lambda_.1} parent=5 // pred_region
      %s180 = ssub.s32 %s9, 1
      %p181 = scmp.lt.s32.totalorder %s18, 1
      %s182 = scalar_select %p181, %s18, 1
      %p183 = scmp.lt.s32.totalorder %s19, 0
      %s184 = scalar_select %p183, %s19, 0
      %s185 = smul.addr %s184, 64
      %s186 = smul.addr %s182, 64
      %s187 = sadd.s32 %s185, %s186
      %s188 = smul.addr %s187, 4
      %s189 = scalar_lea.vmem %s0, %s188
      %p190 = pneg %p49
      %p191 = pneg %p46
      %p192 = scmp.lt.s32.totalorder %s18, 1
      %s193 = scalar_select %p192, %s18, 1
      %s194 = smul.addr %s193, 24
      %s195 = smul.addr %s194, 4
      %s196 = scalar_lea.vmem %s1, %s195
      %p197 = pneg %p75
      %p198 = pneg %p72
      %p199 = scmp.lt.s32.totalorder %s18, 1
      %s200 = scalar_select %p199, %s18, 1
      %s201 = scalar_lea.vmem %s2, %s200
      %p202 = pneg %p101
      %p203 = pneg %p98
      %p204 = pneg %p129
      %p205 = pneg %p126
      %p206 = scmp.lt.s32.totalorder %s18, 1
      %s207 = scalar_select %p206, %s18, 1
      %p208 = scmp.lt.s32.totalorder %s19, 0
      %s209 = scalar_select %p208, %s19, 0
      %s210 = smul.addr %s209, 16
      %s211 = smul.addr %s207, 16
      %s212 = sadd.s32 %s210, %s211
      %s213 = smul.addr %s212, 4
      %s214 = scalar_lea.vmem %s3, %s213
      %p215 = scmp.lt.s32.totalorder %s18, 1
      %s216 = scalar_select %p215, %s18, 1
      %p217 = scmp.lt.s32.totalorder %s19, 0
      %s218 = scalar_select %p217, %s19, 0
      %s219 = smul.addr %s218, 64
      %s220 = smul.addr %s216, 64
      %s221 = sadd.s32 %s219, %s220
      %s222 = smul.addr %s221, 4
      %s223 = scalar_lea.vmem %s0, %s222
      %p224 = scmp.lt.s32.totalorder %s18, 1
      %s225 = scalar_select %p224, %s18, 1
      %s226 = smul.addr %s225, 24
      %s227 = smul.addr %s226, 4
      %s228 = scalar_lea.vmem %s1, %s227
      %p229 = scmp.lt.s32.totalorder %s18, 1
      %s230 = scalar_select %p229, %s18, 1
      %s231 = scalar_lea.vmem %s2, %s230
      %p232 = scmp.lt.s32.totalorder %s18, 1
      %s233 = scalar_select %p232, %s18, 1
      %p234 = scmp.lt.s32.totalorder %s19, 0
      %s235 = scalar_select %p234, %s19, 0
      %s236 = smul.addr %s235, 16
      %s237 = smul.addr %s233, 16
      %s238 = sadd.s32 %s236, %s237
      %s239 = smul.addr %s238, 4
      %s240 = scalar_lea.vmem %s3, %s239
      %v242 = vld [vmem:[%s223] sm:$0xff]
      %v243 = vld [vmem:[%s223 + $0x8] sm:$0xff]
      %v244 = vld [vmem:[%s223 + $0x10] sm:$0xff]
      %v245 = vld [vmem:[%s223 + $0x18] sm:$0xff]
      %v246 = vld [vmem:[%s223 + $0x20] sm:$0xff]
      %v247 = vld [vmem:[%s223 + $0x28] sm:$0xff]
      %v248 = vld [vmem:[%s223 + $0x30] sm:$0xff]
      %v249 = vld [vmem:[%s223 + $0x38] sm:$0xff]
      %v250 = vld [vmem:[%s223 + $0x40] sm:$0xff]
      %v251 = vld [vmem:[%s223 + $0x48] sm:$0xff]
      %v252 = vld [vmem:[%s223 + $0x50] sm:$0xff]
      %v253 = vld [vmem:[%s223 + $0x58] sm:$0xff]
      %v254 = vld [vmem:[%s223 + $0x60] sm:$0xff]
      %v255 = vld [vmem:[%s223 + $0x68] sm:$0xff]
      %v256 = vld [vmem:[%s223 + $0x70] sm:$0xff]
      %v257 = vld [vmem:[%s223 + $0x78] sm:$0xff]
      %v258 = vld [vmem:[%s223 + $0x80] sm:$0xff]
      %v259 = vld [vmem:[%s223 + $0x88] sm:$0xff]
      %v260 = vld [vmem:[%s223 + $0x90] sm:$0xff]
      %v261 = vld [vmem:[%s223 + $0x98] sm:$0xff]
      %v262 = vld [vmem:[%s223 + $0xa0] sm:$0xff]
      %v263 = vld [vmem:[%s223 + $0xa8] sm:$0xff]
      %v264 = vld [vmem:[%s223 + $0xb0] sm:$0xff]
      %v265 = vld [vmem:[%s223 + $0xb8] sm:$0xff]
      %v266 = vld [vmem:[%s223 + $0xc0] sm:$0xff]
      %v267 = vld [vmem:[%s223 + $0xc8] sm:$0xff]
      %v268 = vld [vmem:[%s223 + $0xd0] sm:$0xff]
      %v269 = vld [vmem:[%s223 + $0xd8] sm:$0xff]
      %v270 = vld [vmem:[%s223 + $0xe0] sm:$0xff]
      %v271 = vld [vmem:[%s223 + $0xe8] sm:$0xff]
      %v272 = vld [vmem:[%s223 + $0xf0] sm:$0xff]
      %v273 = vld [vmem:[%s223 + $0xf8] sm:$0xff]
      %v274 = vld [vmem:[%s228] sm:$0xf]
      %v275 = vld [vmem:[%s228 + $0x4] sm:$0xf]
      %v276 = vld [vmem:[%s228 + $0x8] sm:$0xf]
      %v277 = vld [vmem:[%s228 + $0xc] sm:$0xf]
      %v278 = vld [vmem:[%s228 + $0x10] sm:$0xf]
      %v279 = vld [vmem:[%s228 + $0x14] sm:$0xf]
      %v280 = vld [vmem:[%s228 + $0x18] sm:$0xf]
      %v281 = vld [vmem:[%s228 + $0x1c] sm:$0xf]
      %v282 = vld [vmem:[%s228 + $0x20] sm:$0xf]
      %v283 = vld [vmem:[%s228 + $0x24] sm:$0xf]
      %v284 = vld [vmem:[%s228 + $0x28] sm:$0xf]
      %v285 = vld [vmem:[%s228 + $0x2c] sm:$0xf]
      %v286 = vld [vmem:[%s228 + $0x30] sm:$0xf]
      %v287 = vld [vmem:[%s228 + $0x34] sm:$0xf]
      %v288 = vld [vmem:[%s228 + $0x38] sm:$0xf]
      %v289 = vld [vmem:[%s228 + $0x3c] sm:$0xf]
      %v290 = vld [vmem:[%s228 + $0x40] sm:$0xf]
      %v291 = vld [vmem:[%s228 + $0x44] sm:$0xf]
      %v292 = vld [vmem:[%s228 + $0x48] sm:$0xf]
      %v293 = vld [vmem:[%s228 + $0x4c] sm:$0xf]
      %v294 = vld [vmem:[%s228 + $0x50] sm:$0xf]
      %v295 = vld [vmem:[%s228 + $0x54] sm:$0xf]
      %v296 = vld [vmem:[%s228 + $0x58] sm:$0xf]
      %v297 = vld [vmem:[%s228 + $0x5c] sm:$0x7]
      %v298 = vld [vmem:[%s231] sm:$0x1]
      %v300 = vperm.slane %v298, 0
      %v334 = vunpack.c.l.b16 %v242
      %v335 = vunpack.c.h.b16 %v242
      %v336 = vunpack.c.l.b16 %v243
      %v337 = vunpack.c.h.b16 %v243
      %v338 = vunpack.c.l.b16 %v244
      %v339 = vunpack.c.h.b16 %v244
      %v340 = vunpack.c.l.b16 %v245
      %v341 = vunpack.c.h.b16 %v245
      %v342 = vunpack.c.l.b16 %v246
      %v343 = vunpack.c.h.b16 %v246
      %v344 = vunpack.c.l.b16 %v247
      %v345 = vunpack.c.h.b16 %v247
      %v346 = vunpack.c.l.b16 %v248
      %v347 = vunpack.c.h.b16 %v248
      %v348 = vunpack.c.l.b16 %v249
      %v349 = vunpack.c.h.b16 %v249
      %v350 = vunpack.c.l.b16 %v250
      %v351 = vunpack.c.h.b16 %v250
      %v352 = vunpack.c.l.b16 %v251
      %v353 = vunpack.c.h.b16 %v251
      %v354 = vunpack.c.l.b16 %v252
      %v355 = vunpack.c.h.b16 %v252
      %v356 = vunpack.c.l.b16 %v253
      %v357 = vunpack.c.h.b16 %v253
      %v358 = vunpack.c.l.b16 %v254
      %v359 = vunpack.c.h.b16 %v254
      %v360 = vunpack.c.l.b16 %v255
      %v361 = vunpack.c.h.b16 %v255
      %v362 = vunpack.c.l.b16 %v256
      %v363 = vunpack.c.h.b16 %v256
      %v364 = vunpack.c.l.b16 %v257
      %v365 = vunpack.c.h.b16 %v257
      %v366 = vunpack.c.l.b16 %v258
      %v367 = vunpack.c.h.b16 %v258
      %v368 = vunpack.c.l.b16 %v259
      %v369 = vunpack.c.h.b16 %v259
      %v370 = vunpack.c.l.b16 %v260
      %v371 = vunpack.c.h.b16 %v260
      %v372 = vunpack.c.l.b16 %v261
      %v373 = vunpack.c.h.b16 %v261
      %v374 = vunpack.c.l.b16 %v262
      %v375 = vunpack.c.h.b16 %v262
      %v376 = vunpack.c.l.b16 %v263
      %v377 = vunpack.c.h.b16 %v263
      %v378 = vunpack.c.l.b16 %v264
      %v379 = vunpack.c.h.b16 %v264
      %v380 = vunpack.c.l.b16 %v265
      %v381 = vunpack.c.h.b16 %v265
      %v382 = vunpack.c.l.b16 %v266
      %v383 = vunpack.c.h.b16 %v266
      %v384 = vunpack.c.l.b16 %v267
      %v385 = vunpack.c.h.b16 %v267
      %v386 = vunpack.c.l.b16 %v268
      %v387 = vunpack.c.h.b16 %v268
      %v388 = vunpack.c.l.b16 %v269
      %v389 = vunpack.c.h.b16 %v269
      %v390 = vunpack.c.l.b16 %v270
      %v391 = vunpack.c.h.b16 %v270
      %v392 = vunpack.c.l.b16 %v271
      %v393 = vunpack.c.h.b16 %v271
      %v394 = vunpack.c.l.b16 %v272
      %v395 = vunpack.c.h.b16 %v272
      %v396 = vunpack.c.l.b16 %v273
      %v397 = vunpack.c.h.b16 %v273
      %v398 = vpack.c.b16 %v336, %v334
      %v399 = vpack.c.b16 %v337, %v335
      %v400 = vpack.c.b16 %v340, %v338
      %v401 = vpack.c.b16 %v341, %v339
      %v402 = vpack.c.b16 %v344, %v342
      %v403 = vpack.c.b16 %v345, %v343
      %v404 = vpack.c.b16 %v348, %v346
      %v405 = vpack.c.b16 %v349, %v347
      %v406 = vpack.c.b16 %v352, %v350
      %v407 = vpack.c.b16 %v353, %v351
      %v408 = vpack.c.b16 %v356, %v354
      %v409 = vpack.c.b16 %v357, %v355
      %v410 = vpack.c.b16 %v360, %v358
      %v411 = vpack.c.b16 %v361, %v359
      %v412 = vpack.c.b16 %v364, %v362
      %v413 = vpack.c.b16 %v365, %v363
      %v414 = vpack.c.b16 %v368, %v366
      %v415 = vpack.c.b16 %v369, %v367
      %v416 = vpack.c.b16 %v372, %v370
      %v417 = vpack.c.b16 %v373, %v371
      %v418 = vpack.c.b16 %v376, %v374
      %v419 = vpack.c.b16 %v377, %v375
      %v420 = vpack.c.b16 %v380, %v378
      %v421 = vpack.c.b16 %v381, %v379
      %v422 = vpack.c.b16 %v384, %v382
      %v423 = vpack.c.b16 %v385, %v383
      %v424 = vpack.c.b16 %v388, %v386
      %v425 = vpack.c.b16 %v389, %v387
      %v426 = vpack.c.b16 %v392, %v390
      %v427 = vpack.c.b16 %v393, %v391
      %v428 = vpack.c.b16 %v396, %v394
      %v429 = vpack.c.b16 %v397, %v395
      %v470 = vunpack.c.l.b16 %v274
      %v471 = vunpack.c.l.b16 %v275
      %v472 = vunpack.c.l.b16 %v276
      %v473 = vunpack.c.l.b16 %v277
      %v474 = vunpack.c.l.b16 %v278
      %v475 = vunpack.c.l.b16 %v279
      %v476 = vunpack.c.l.b16 %v280
      %v477 = vunpack.c.l.b16 %v281
      %v478 = vunpack.c.l.b16 %v282
      %v479 = vunpack.c.l.b16 %v283
      %v480 = vunpack.c.l.b16 %v284
      %v481 = vunpack.c.l.b16 %v285
      %v482 = vunpack.c.l.b16 %v286
      %v483 = vunpack.c.l.b16 %v287
      %v484 = vunpack.c.l.b16 %v288
      %v485 = vunpack.c.l.b16 %v289
      %v486 = vunpack.c.l.b16 %v290
      %v487 = vunpack.c.l.b16 %v291
      %v488 = vunpack.c.l.b16 %v292
      %v489 = vunpack.c.l.b16 %v293
      %v490 = vunpack.c.l.b16 %v294
      %v491 = vunpack.c.l.b16 %v295
      %v492 = vunpack.c.l.b16 %v296
      %v493 = vunpack.c.l.b16 %v297
      %v494 = vpack.c.b16 %v471, %v470
      %v495 = vpack.c.b16 %v473, %v472
      %v496 = vpack.c.b16 %v475, %v474
      %v497 = vpack.c.b16 %v477, %v476
      %v498 = vpack.c.b16 %v479, %v478
      %v499 = vpack.c.b16 %v481, %v480
      %v500 = vpack.c.b16 %v483, %v482
      %v501 = vpack.c.b16 %v485, %v484
      %v502 = vpack.c.b16 %v487, %v486
      %v503 = vpack.c.b16 %v489, %v488
      %v504 = vpack.c.b16 %v491, %v490
      %v505 = vpack.c.b16 %v493, %v492
      %vm517 = vcmask 498688
      %v519 = vsel %vm517, %v399, 0
      %v522 = vsel %vm517, %v401, 0
      %v525 = vsel %vm517, %v403, 0
      %v528 = vsel %vm517, %v405, 0
      %v531 = vsel %vm517, %v407, 0
      %v534 = vsel %vm517, %v409, 0
      %v537 = vsel %vm517, %v411, 0
      %v540 = vsel %vm517, %v413, 0
      %v543 = vsel %vm517, %v415, 0
      %v546 = vsel %vm517, %v417, 0
      %v549 = vsel %vm517, %v419, 0
      %v552 = vsel %vm517, %v421, 0
      %v555 = vsel %vm517, %v423, 0
      %v558 = vsel %vm517, %v425, 0
      %v561 = vsel %vm517, %v427, 0
      %v564 = vsel %vm517, %v429, 0
      %vm566 = vcmask 1045504
      %vm567 = vcmask 1046528
      %v568 = vsel %vm566, 4294967295, 65535
      %v569 = vsel %vm567, %v568, 0
      %v571 = vand.u32 %v505, %v569
      %573 = vmatpush.bf16.msra.mxu0 %v501
      %574 = vmatpush.bf16.msra.mxu0 %v500
      %575 = vmatpush.bf16.msra.mxu0 %v499
      %576 = vmatpush.bf16.msra.mxu0 %v498
      %577 = vmatpush.bf16.msra.mxu0 %v497
      %578 = vmatpush.bf16.msra.mxu0 %v496
      %579 = vmatpush.bf16.msra.mxu0 %v495
      %580 = vmatpush.bf16.msra.mxu0 %v494
      %581 = vmatmul.bf16.gmra.mxu0 %v398
      %v582 = vpop.f32.mrf.mxu0
      %v583 = vadd.f32 %v300, %v582
      %v584 = vpop.f32.mrf.mxu0
      %v585 = vadd.f32 %v300, %v584
      %586 = vmatmul.bf16.gmra.mxu0 %v400
      %v587 = vpop.f32.mrf.mxu0
      %v588 = vadd.f32 %v300, %v587
      %v589 = vpop.f32.mrf.mxu0
      %v590 = vadd.f32 %v300, %v589
      %591 = vmatmul.bf16.gmra.mxu0 %v402
      %v592 = vpop.f32.mrf.mxu0
      %v593 = vadd.f32 %v300, %v592
      %v594 = vpop.f32.mrf.mxu0
      %v595 = vadd.f32 %v300, %v594
      %596 = vmatmul.bf16.gmra.mxu0 %v404
      %v597 = vpop.f32.mrf.mxu0
      %v598 = vadd.f32 %v300, %v597
      %v599 = vpop.f32.mrf.mxu0
      %v600 = vadd.f32 %v300, %v599
      %601 = vmatmul.bf16.gmra.mxu0 %v406
      %v602 = vpop.f32.mrf.mxu0
      %v603 = vadd.f32 %v300, %v602
      %v604 = vpop.f32.mrf.mxu0
      %v605 = vadd.f32 %v300, %v604
      %606 = vmatmul.bf16.gmra.mxu0 %v408
      %v607 = vpop.f32.mrf.mxu0
      %v608 = vadd.f32 %v300, %v607
      %v609 = vpop.f32.mrf.mxu0
      %v610 = vadd.f32 %v300, %v609
      %611 = vmatmul.bf16.gmra.mxu0 %v410
      %v612 = vpop.f32.mrf.mxu0
      %v613 = vadd.f32 %v300, %v612
      %v614 = vpop.f32.mrf.mxu0
      %v615 = vadd.f32 %v300, %v614
      %616 = vmatmul.bf16.gmra.mxu0 %v412
      %v617 = vpop.f32.mrf.mxu0
      %v618 = vadd.f32 %v300, %v617
      %v619 = vpop.f32.mrf.mxu0
      %v620 = vadd.f32 %v300, %v619
      %621 = vmatmul.bf16.gmra.mxu0 %v414
      %v622 = vpop.f32.mrf.mxu0
      %v623 = vadd.f32 %v300, %v622
      %v624 = vpop.f32.mrf.mxu0
      %v625 = vadd.f32 %v300, %v624
      %626 = vmatmul.bf16.gmra.mxu0 %v416
      %v627 = vpop.f32.mrf.mxu0
      %v628 = vadd.f32 %v300, %v627
      %v629 = vpop.f32.mrf.mxu0
      %v630 = vadd.f32 %v300, %v629
      %631 = vmatmul.bf16.gmra.mxu0 %v418
      %v632 = vpop.f32.mrf.mxu0
      %v633 = vadd.f32 %v300, %v632
      %v634 = vpop.f32.mrf.mxu0
      %v635 = vadd.f32 %v300, %v634
      %636 = vmatmul.bf16.gmra.mxu0 %v420
      %v637 = vpop.f32.mrf.mxu0
      %v638 = vadd.f32 %v300, %v637
      %v639 = vpop.f32.mrf.mxu0
      %v640 = vadd.f32 %v300, %v639
      %641 = vmatmul.bf16.gmra.mxu0 %v422
      %v642 = vpop.f32.mrf.mxu0
      %v643 = vadd.f32 %v300, %v642
      %v644 = vpop.f32.mrf.mxu0
      %v645 = vadd.f32 %v300, %v644
      %646 = vmatmul.bf16.gmra.mxu0 %v424
      %v647 = vpop.f32.mrf.mxu0
      %v648 = vadd.f32 %v300, %v647
      %v649 = vpop.f32.mrf.mxu0
      %v650 = vadd.f32 %v300, %v649
      %651 = vmatmul.bf16.gmra.mxu0 %v426
      %v652 = vpop.f32.mrf.mxu0
      %v653 = vadd.f32 %v300, %v652
      %v654 = vpop.f32.mrf.mxu0
      %v655 = vadd.f32 %v300, %v654
      %656 = vmatmul.bf16.gmra.mxu0 %v428
      %v657 = vpop.f32.mrf.mxu0
      %v658 = vadd.f32 %v300, %v657
      %v659 = vpop.f32.mrf.mxu0
      %v660 = vadd.f32 %v300, %v659
      %661 = vdwg.mxu0
      %662 = vmatpush.bf16.msra.mxu0 0
      %663 = vmatpush.bf16.msra.mxu0 0
      %664 = vmatpush.bf16.msra.mxu0 0
      %665 = vmatpush.bf16.msra.mxu0 0
      %666 = vmatpush.bf16.msra.mxu0 %v571
      %667 = vmatpush.bf16.msra.mxu0 %v504
      %668 = vmatpush.bf16.msra.mxu0 %v503
      %669 = vmatpush.bf16.msra.mxu0 %v502
      %670 = vmatmul.bf16.gmra.mxu0 %v519
      %v671 = vpop.f32.mrf.mxu0
      %v672 = vadd.f32 %v583, %v671
      %v673 = vpop.f32.mrf.mxu0
      %v674 = vadd.f32 %v585, %v673
      %675 = vmatmul.bf16.gmra.mxu0 %v522
      %v676 = vpop.f32.mrf.mxu0
      %v677 = vadd.f32 %v588, %v676
      %v678 = vpop.f32.mrf.mxu0
      %v679 = vadd.f32 %v590, %v678
      %680 = vmatmul.bf16.gmra.mxu0 %v525
      %v681 = vpop.f32.mrf.mxu0
      %v682 = vadd.f32 %v593, %v681
      %v683 = vpop.f32.mrf.mxu0
      %v684 = vadd.f32 %v595, %v683
      %685 = vmatmul.bf16.gmra.mxu0 %v528
      %v686 = vpop.f32.mrf.mxu0
      %v687 = vadd.f32 %v598, %v686
      %v688 = vpop.f32.mrf.mxu0
      %v689 = vadd.f32 %v600, %v688
      %690 = vmatmul.bf16.gmra.mxu0 %v531
      %v691 = vpop.f32.mrf.mxu0
      %v692 = vadd.f32 %v603, %v691
      %v693 = vpop.f32.mrf.mxu0
      %v694 = vadd.f32 %v605, %v693
      %695 = vmatmul.bf16.gmra.mxu0 %v534
      %v696 = vpop.f32.mrf.mxu0
      %v697 = vadd.f32 %v608, %v696
      %v698 = vpop.f32.mrf.mxu0
      %v699 = vadd.f32 %v610, %v698
      %700 = vmatmul.bf16.gmra.mxu0 %v537
      %v701 = vpop.f32.mrf.mxu0
      %v702 = vadd.f32 %v613, %v701
      %v703 = vpop.f32.mrf.mxu0
      %v704 = vadd.f32 %v615, %v703
      %705 = vmatmul.bf16.gmra.mxu0 %v540
      %v706 = vpop.f32.mrf.mxu0
      %v707 = vadd.f32 %v618, %v706
      %v708 = vpop.f32.mrf.mxu0
      %v709 = vadd.f32 %v620, %v708
      %710 = vmatmul.bf16.gmra.mxu0 %v543
      %v711 = vpop.f32.mrf.mxu0
      %v712 = vadd.f32 %v623, %v711
      %v713 = vpop.f32.mrf.mxu0
      %v714 = vadd.f32 %v625, %v713
      %715 = vmatmul.bf16.gmra.mxu0 %v546
      %v716 = vpop.f32.mrf.mxu0
      %v717 = vadd.f32 %v628, %v716
      %v718 = vpop.f32.mrf.mxu0
      %v719 = vadd.f32 %v630, %v718
      %720 = vmatmul.bf16.gmra.mxu0 %v549
      %v721 = vpop.f32.mrf.mxu0
      %v722 = vadd.f32 %v633, %v721
      %v723 = vpop.f32.mrf.mxu0
      %v724 = vadd.f32 %v635, %v723
      %725 = vmatmul.bf16.gmra.mxu0 %v552
      %v726 = vpop.f32.mrf.mxu0
      %v727 = vadd.f32 %v638, %v726
      %v728 = vpop.f32.mrf.mxu0
      %v729 = vadd.f32 %v640, %v728
      %730 = vmatmul.bf16.gmra.mxu0 %v555
      %v731 = vpop.f32.mrf.mxu0
      %v732 = vadd.f32 %v643, %v731
      %v733 = vpop.f32.mrf.mxu0
      %v734 = vadd.f32 %v645, %v733
      %735 = vmatmul.bf16.gmra.mxu0 %v558
      %v736 = vpop.f32.mrf.mxu0
      %v737 = vadd.f32 %v648, %v736
      %v738 = vpop.f32.mrf.mxu0
      %v739 = vadd.f32 %v650, %v738
      %740 = vmatmul.bf16.gmra.mxu0 %v561
      %v741 = vpop.f32.mrf.mxu0
      %v742 = vadd.f32 %v653, %v741
      %v743 = vpop.f32.mrf.mxu0
      %v744 = vadd.f32 %v655, %v743
      %745 = vmatmul.bf16.gmra.mxu0 %v564
      %v746 = vpop.f32.mrf.mxu0
      %v747 = vadd.f32 %v658, %v746
      %v748 = vpop.f32.mrf.mxu0
      %v749 = vadd.f32 %v660, %v748
      %750 = vdwg.mxu0
      %v751 = vmax.f32 %v672, 0.0
      %v752 = vmax.f32 %v674, 0.0
      %v753 = vmax.f32 %v677, 0.0
      %v754 = vmax.f32 %v679, 0.0
      %v755 = vmax.f32 %v682, 0.0
      %v756 = vmax.f32 %v684, 0.0
      %v757 = vmax.f32 %v687, 0.0
      %v758 = vmax.f32 %v689, 0.0
      %v759 = vmax.f32 %v692, 0.0
      %v760 = vmax.f32 %v694, 0.0
      %v761 = vmax.f32 %v697, 0.0
      %v762 = vmax.f32 %v699, 0.0
      %v763 = vmax.f32 %v702, 0.0
      %v764 = vmax.f32 %v704, 0.0
      %v765 = vmax.f32 %v707, 0.0
      %v766 = vmax.f32 %v709, 0.0
      %v767 = vmax.f32 %v712, 0.0
      %v768 = vmax.f32 %v714, 0.0
      %v769 = vmax.f32 %v717, 0.0
      %v770 = vmax.f32 %v719, 0.0
      %v771 = vmax.f32 %v722, 0.0
      %v772 = vmax.f32 %v724, 0.0
      %v773 = vmax.f32 %v727, 0.0
      %v774 = vmax.f32 %v729, 0.0
      %v775 = vmax.f32 %v732, 0.0
      %v776 = vmax.f32 %v734, 0.0
      %v777 = vmax.f32 %v737, 0.0
      %v778 = vmax.f32 %v739, 0.0
      %v779 = vmax.f32 %v742, 0.0
      %v780 = vmax.f32 %v744, 0.0
      %v781 = vmax.f32 %v747, 0.0
      %v782 = vmax.f32 %v749, 0.0
      %783 = vrot.lane.b32.xlu0 %v751, 64
      %v784 = vpop.permute.xlu0 %783
      %785 = vrot.lane.b32.xlu0 %v752, 64
      %v786 = vpop.permute.xlu0 %785
      %787 = vrot.lane.b32.xlu0 %v753, 64
      %v788 = vpop.permute.xlu0 %787
      %789 = vrot.lane.b32.xlu0 %v754, 64
      %v790 = vpop.permute.xlu0 %789
      %791 = vrot.lane.b32.xlu0 %v755, 64
      %v792 = vpop.permute.xlu0 %791
      %793 = vrot.lane.b32.xlu0 %v756, 64
      %v794 = vpop.permute.xlu0 %793
      %795 = vrot.lane.b32.xlu0 %v757, 64
      %v796 = vpop.permute.xlu0 %795
      %797 = vrot.lane.b32.xlu0 %v758, 64
      %v798 = vpop.permute.xlu0 %797
      %799 = vrot.lane.b32.xlu0 %v759, 64
      %v800 = vpop.permute.xlu0 %799
      %801 = vrot.lane.b32.xlu0 %v760, 64
      %v802 = vpop.permute.xlu0 %801
      %803 = vrot.lane.b32.xlu0 %v761, 64
      %v804 = vpop.permute.xlu0 %803
      %805 = vrot.lane.b32.xlu0 %v762, 64
      %v806 = vpop.permute.xlu0 %805
      %807 = vrot.lane.b32.xlu0 %v763, 64
      %v808 = vpop.permute.xlu0 %807
      %809 = vrot.lane.b32.xlu0 %v764, 64
      %v810 = vpop.permute.xlu0 %809
      %811 = vrot.lane.b32.xlu0 %v765, 64
      %v812 = vpop.permute.xlu0 %811
      %813 = vrot.lane.b32.xlu0 %v766, 64
      %v814 = vpop.permute.xlu0 %813
      %815 = vrot.lane.b32.xlu0 %v767, 64
      %v816 = vpop.permute.xlu0 %815
      %817 = vrot.lane.b32.xlu0 %v768, 64
      %v818 = vpop.permute.xlu0 %817
      %819 = vrot.lane.b32.xlu0 %v769, 64
      %v820 = vpop.permute.xlu0 %819
      %821 = vrot.lane.b32.xlu0 %v770, 64
      %v822 = vpop.permute.xlu0 %821
      %823 = vrot.lane.b32.xlu0 %v771, 64
      %v824 = vpop.permute.xlu0 %823
      %825 = vrot.lane.b32.xlu0 %v772, 64
      %v826 = vpop.permute.xlu0 %825
      %827 = vrot.lane.b32.xlu0 %v773, 64
      %v828 = vpop.permute.xlu0 %827
      %829 = vrot.lane.b32.xlu0 %v774, 64
      %v830 = vpop.permute.xlu0 %829
      %831 = vrot.lane.b32.xlu0 %v775, 64
      %v832 = vpop.permute.xlu0 %831
      %833 = vrot.lane.b32.xlu0 %v776, 64
      %v834 = vpop.permute.xlu0 %833
      %835 = vrot.lane.b32.xlu0 %v777, 64
      %v836 = vpop.permute.xlu0 %835
      %837 = vrot.lane.b32.xlu0 %v778, 64
      %v838 = vpop.permute.xlu0 %837
      %839 = vrot.lane.b32.xlu0 %v779, 64
      %v840 = vpop.permute.xlu0 %839
      %841 = vrot.lane.b32.xlu0 %v780, 64
      %v842 = vpop.permute.xlu0 %841
      %843 = vrot.lane.b32.xlu0 %v781, 64
      %v844 = vpop.permute.xlu0 %843
      %845 = vrot.lane.b32.xlu0 %v782, 64
      %v846 = vpop.permute.xlu0 %845
      %v847 = vlaneseq
      %v848 = vshrl.u32 %v847, 7
      %v849 = vadd.s32 %v848, 8
      %v850 = vadd.s32 %v848, 16
      %v851 = vadd.s32 %v848, 24
      %v852 = vadd.s32 %v848, 32
      %v853 = vadd.s32 %v848, 40
      %v854 = vadd.s32 %v848, 48
      %v855 = vadd.s32 %v848, 56
      %v856 = vadd.s32 %v848, 64
      %v857 = vadd.s32 %v848, 72
      %v858 = vadd.s32 %v848, 80
      %v859 = vadd.s32 %v848, 88
      %v860 = vadd.s32 %v848, 96
      %v861 = vadd.s32 %v848, 104
      %v862 = vadd.s32 %v848, 112
      %v863 = vadd.s32 %v848, 120
      %v864 = vadd.s32 %v848, 128
      %v865 = vadd.s32 %v848, 136
      %v866 = vadd.s32 %v848, 144
      %v867 = vadd.s32 %v848, 152
      %v868 = vadd.s32 %v848, 160
      %v869 = vadd.s32 %v848, 168
      %v870 = vadd.s32 %v848, 176
      %v871 = vadd.s32 %v848, 184
      %v872 = vadd.s32 %v848, 192
      %v873 = vadd.s32 %v848, 200
      %v874 = vadd.s32 %v848, 208
      %v875 = vadd.s32 %v848, 216
      %v876 = vadd.s32 %v848, 224
      %v877 = vadd.s32 %v848, 232
      %v878 = vadd.s32 %v848, 240
      %v879 = vadd.s32 %v848, 248
      %vm880 = vcmp.lt.s32.totalorder %v848, 0
      %v881 = vsub.s32 0, %v848
      %v882 = vsel %vm880, %v881, %v848
      %v883 = vshrl.u32 %v882, 3
      %v884 = vand.u32 %v882, 7
      %v885 = vsub.s32 0, %v884
      %v886 = vsel %vm880, %v885, %v884
      %vm887 = vcmp.lt.s32.totalorder %v849, 0
      %v888 = vsub.s32 0, %v849
      %v889 = vsel %vm887, %v888, %v849
      %v890 = vshrl.u32 %v889, 3
      %v891 = vand.u32 %v889, 7
      %v892 = vsub.s32 0, %v891
      %v893 = vsel %vm887, %v892, %v891
      %vm894 = vcmp.lt.s32.totalorder %v850, 0
      %v895 = vsub.s32 0, %v850
      %v896 = vsel %vm894, %v895, %v850
      %v897 = vshrl.u32 %v896, 3
      %v898 = vand.u32 %v896, 7
      %v899 = vsub.s32 0, %v898
      %v900 = vsel %vm894, %v899, %v898
      %vm901 = vcmp.lt.s32.totalorder %v851, 0
      %v902 = vsub.s32 0, %v851
      %v903 = vsel %vm901, %v902, %v851
      %v904 = vshrl.u32 %v903, 3
      %v905 = vand.u32 %v903, 7
      %v906 = vsub.s32 0, %v905
      %v907 = vsel %vm901, %v906, %v905
      %vm908 = vcmp.lt.s32.totalorder %v852, 0
      %v909 = vsub.s32 0, %v852
      %v910 = vsel %vm908, %v909, %v852
      %v911 = vshrl.u32 %v910, 3
      %v912 = vand.u32 %v910, 7
      %v913 = vsub.s32 0, %v912
      %v914 = vsel %vm908, %v913, %v912
      %vm915 = vcmp.lt.s32.totalorder %v853, 0
      %v916 = vsub.s32 0, %v853
      %v917 = vsel %vm915, %v916, %v853
      %v918 = vshrl.u32 %v917, 3
      %v919 = vand.u32 %v917, 7
      %v920 = vsub.s32 0, %v919
      %v921 = vsel %vm915, %v920, %v919
      %vm922 = vcmp.lt.s32.totalorder %v854, 0
      %v923 = vsub.s32 0, %v854
      %v924 = vsel %vm922, %v923, %v854
      %v925 = vshrl.u32 %v924, 3
      %v926 = vand.u32 %v924, 7
      %v927 = vsub.s32 0, %v926
      %v928 = vsel %vm922, %v927, %v926
      %vm929 = vcmp.lt.s32.totalorder %v855, 0
      %v930 = vsub.s32 0, %v855
      %v931 = vsel %vm929, %v930, %v855
      %v932 = vshrl.u32 %v931, 3
      %v933 = vand.u32 %v931, 7
      %v934 = vsub.s32 0, %v933
      %v935 = vsel %vm929, %v934, %v933
      %vm936 = vcmp.lt.s32.totalorder %v856, 0
      %v937 = vsub.s32 0, %v856
      %v938 = vsel %vm936, %v937, %v856
      %v939 = vshrl.u32 %v938, 3
      %v940 = vand.u32 %v938, 7
      %v941 = vsub.s32 0, %v940
      %v942 = vsel %vm936, %v941, %v940
      %vm943 = vcmp.lt.s32.totalorder %v857, 0
      %v944 = vsub.s32 0, %v857
      %v945 = vsel %vm943, %v944, %v857
      %v946 = vshrl.u32 %v945, 3
      %v947 = vand.u32 %v945, 7
      %v948 = vsub.s32 0, %v947
      %v949 = vsel %vm943, %v948, %v947
      %vm950 = vcmp.lt.s32.totalorder %v858, 0
      %v951 = vsub.s32 0, %v858
      %v952 = vsel %vm950, %v951, %v858
      %v953 = vshrl.u32 %v952, 3
      %v954 = vand.u32 %v952, 7
      %v955 = vsub.s32 0, %v954
      %v956 = vsel %vm950, %v955, %v954
      %vm957 = vcmp.lt.s32.totalorder %v859, 0
      %v958 = vsub.s32 0, %v859
      %v959 = vsel %vm957, %v958, %v859
      %v960 = vshrl.u32 %v959, 3
      %v961 = vand.u32 %v959, 7
      %v962 = vsub.s32 0, %v961
      %v963 = vsel %vm957, %v962, %v961
      %vm964 = vcmp.lt.s32.totalorder %v860, 0
      %v965 = vsub.s32 0, %v860
      %v966 = vsel %vm964, %v965, %v860
      %v967 = vshrl.u32 %v966, 3
      %v968 = vand.u32 %v966, 7
      %v969 = vsub.s32 0, %v968
      %v970 = vsel %vm964, %v969, %v968
      %vm971 = vcmp.lt.s32.totalorder %v861, 0
      %v972 = vsub.s32 0, %v861
      %v973 = vsel %vm971, %v972, %v861
      %v974 = vshrl.u32 %v973, 3
      %v975 = vand.u32 %v973, 7
      %v976 = vsub.s32 0, %v975
      %v977 = vsel %vm971, %v976, %v975
      %vm978 = vcmp.lt.s32.totalorder %v862, 0
      %v979 = vsub.s32 0, %v862
      %v980 = vsel %vm978, %v979, %v862
      %v981 = vshrl.u32 %v980, 3
      %v982 = vand.u32 %v980, 7
      %v983 = vsub.s32 0, %v982
      %v984 = vsel %vm978, %v983, %v982
      %vm985 = vcmp.lt.s32.totalorder %v863, 0
      %v986 = vsub.s32 0, %v863
      %v987 = vsel %vm985, %v986, %v863
      %v988 = vshrl.u32 %v987, 3
      %v989 = vand.u32 %v987, 7
      %v990 = vsub.s32 0, %v989
      %v991 = vsel %vm985, %v990, %v989
      %vm992 = vcmp.lt.s32.totalorder %v864, 0
      %v993 = vsub.s32 0, %v864
      %v994 = vsel %vm992, %v993, %v864
      %v995 = vshrl.u32 %v994, 3
      %v996 = vand.u32 %v994, 7
      %v997 = vsub.s32 0, %v996
      %v998 = vsel %vm992, %v997, %v996
      %vm999 = vcmp.lt.s32.totalorder %v865, 0
      %v1000 = vsub.s32 0, %v865
      %v1001 = vsel %vm999, %v1000, %v865
      %v1002 = vshrl.u32 %v1001, 3
      %v1003 = vand.u32 %v1001, 7
      %v1004 = vsub.s32 0, %v1003
      %v1005 = vsel %vm999, %v1004, %v1003
      %vm1006 = vcmp.lt.s32.totalorder %v866, 0
      %v1007 = vsub.s32 0, %v866
      %v1008 = vsel %vm1006, %v1007, %v866
      %v1009 = vshrl.u32 %v1008, 3
      %v1010 = vand.u32 %v1008, 7
      %v1011 = vsub.s32 0, %v1010
      %v1012 = vsel %vm1006, %v1011, %v1010
      %vm1013 = vcmp.lt.s32.totalorder %v867, 0
      %v1014 = vsub.s32 0, %v867
      %v1015 = vsel %vm1013, %v1014, %v867
      %v1016 = vshrl.u32 %v1015, 3
      %v1017 = vand.u32 %v1015, 7
      %v1018 = vsub.s32 0, %v1017
      %v1019 = vsel %vm1013, %v1018, %v1017
      %vm1020 = vcmp.lt.s32.totalorder %v868, 0
      %v1021 = vsub.s32 0, %v868
      %v1022 = vsel %vm1020, %v1021, %v868
      %v1023 = vshrl.u32 %v1022, 3
      %v1024 = vand.u32 %v1022, 7
      %v1025 = vsub.s32 0, %v1024
      %v1026 = vsel %vm1020, %v1025, %v1024
      %vm1027 = vcmp.lt.s32.totalorder %v869, 0
      %v1028 = vsub.s32 0, %v869
      %v1029 = vsel %vm1027, %v1028, %v869
      %v1030 = vshrl.u32 %v1029, 3
      %v1031 = vand.u32 %v1029, 7
      %v1032 = vsub.s32 0, %v1031
      %v1033 = vsel %vm1027, %v1032, %v1031
      %vm1034 = vcmp.lt.s32.totalorder %v870, 0
      %v1035 = vsub.s32 0, %v870
      %v1036 = vsel %vm1034, %v1035, %v870
      %v1037 = vshrl.u32 %v1036, 3
      %v1038 = vand.u32 %v1036, 7
      %v1039 = vsub.s32 0, %v1038
      %v1040 = vsel %vm1034, %v1039, %v1038
      %vm1041 = vcmp.lt.s32.totalorder %v871, 0
      %v1042 = vsub.s32 0, %v871
      %v1043 = vsel %vm1041, %v1042, %v871
      %v1044 = vshrl.u32 %v1043, 3
      %v1045 = vand.u32 %v1043, 7
      %v1046 = vsub.s32 0, %v1045
      %v1047 = vsel %vm1041, %v1046, %v1045
      %vm1048 = vcmp.lt.s32.totalorder %v872, 0
      %v1049 = vsub.s32 0, %v872
      %v1050 = vsel %vm1048, %v1049, %v872
      %v1051 = vshrl.u32 %v1050, 3
      %v1052 = vand.u32 %v1050, 7
      %v1053 = vsub.s32 0, %v1052
      %v1054 = vsel %vm1048, %v1053, %v1052
      %vm1055 = vcmp.lt.s32.totalorder %v873, 0
      %v1056 = vsub.s32 0, %v873
      %v1057 = vsel %vm1055, %v1056, %v873
      %v1058 = vshrl.u32 %v1057, 3
      %v1059 = vand.u32 %v1057, 7
      %v1060 = vsub.s32 0, %v1059
      %v1061 = vsel %vm1055, %v1060, %v1059
      %vm1062 = vcmp.lt.s32.totalorder %v874, 0
      %v1063 = vsub.s32 0, %v874
      %v1064 = vsel %vm1062, %v1063, %v874
      %v1065 = vshrl.u32 %v1064, 3
      %v1066 = vand.u32 %v1064, 7
      %v1067 = vsub.s32 0, %v1066
      %v1068 = vsel %vm1062, %v1067, %v1066
      %vm1069 = vcmp.lt.s32.totalorder %v875, 0
      %v1070 = vsub.s32 0, %v875
      %v1071 = vsel %vm1069, %v1070, %v875
      %v1072 = vshrl.u32 %v1071, 3
      %v1073 = vand.u32 %v1071, 7
      %v1074 = vsub.s32 0, %v1073
      %v1075 = vsel %vm1069, %v1074, %v1073
      %vm1076 = vcmp.lt.s32.totalorder %v876, 0
      %v1077 = vsub.s32 0, %v876
      %v1078 = vsel %vm1076, %v1077, %v876
      %v1079 = vshrl.u32 %v1078, 3
      %v1080 = vand.u32 %v1078, 7
      %v1081 = vsub.s32 0, %v1080
      %v1082 = vsel %vm1076, %v1081, %v1080
      %vm1083 = vcmp.lt.s32.totalorder %v877, 0
      %v1084 = vsub.s32 0, %v877
      %v1085 = vsel %vm1083, %v1084, %v877
      %v1086 = vshrl.u32 %v1085, 3
      %v1087 = vand.u32 %v1085, 7
      %v1088 = vsub.s32 0, %v1087
      %v1089 = vsel %vm1083, %v1088, %v1087
      %vm1090 = vcmp.lt.s32.totalorder %v878, 0
      %v1091 = vsub.s32 0, %v878
      %v1092 = vsel %vm1090, %v1091, %v878
      %v1093 = vshrl.u32 %v1092, 3
      %v1094 = vand.u32 %v1092, 7
      %v1095 = vsub.s32 0, %v1094
      %v1096 = vsel %vm1090, %v1095, %v1094
      %vm1097 = vcmp.lt.s32.totalorder %v879, 0
      %v1098 = vsub.s32 0, %v879
      %v1099 = vsel %vm1097, %v1098, %v879
      %v1100 = vshrl.u32 %v1099, 3
      %v1101 = vand.u32 %v1099, 7
      %v1102 = vsub.s32 0, %v1101
      %v1103 = vsel %vm1097, %v1102, %v1101
      %vm1104 = vcmp.ne.s32.totalorder %v886, 0
      %vm1105 = vcmp.ne.s32.totalorder %v893, 0
      %vm1106 = vcmp.ne.s32.totalorder %v900, 0
      %vm1107 = vcmp.ne.s32.totalorder %v907, 0
      %vm1108 = vcmp.ne.s32.totalorder %v914, 0
      %vm1109 = vcmp.ne.s32.totalorder %v921, 0
      %vm1110 = vcmp.ne.s32.totalorder %v928, 0
      %vm1111 = vcmp.ne.s32.totalorder %v935, 0
      %vm1112 = vcmp.ne.s32.totalorder %v942, 0
      %vm1113 = vcmp.ne.s32.totalorder %v949, 0
      %vm1114 = vcmp.ne.s32.totalorder %v956, 0
      %vm1115 = vcmp.ne.s32.totalorder %v963, 0
      %vm1116 = vcmp.ne.s32.totalorder %v970, 0
      %vm1117 = vcmp.ne.s32.totalorder %v977, 0
      %vm1118 = vcmp.ne.s32.totalorder %v984, 0
      %vm1119 = vcmp.ne.s32.totalorder %v991, 0
      %vm1120 = vcmp.ne.s32.totalorder %v998, 0
      %vm1121 = vcmp.ne.s32.totalorder %v1005, 0
      %vm1122 = vcmp.ne.s32.totalorder %v1012, 0
      %vm1123 = vcmp.ne.s32.totalorder %v1019, 0
      %vm1124 = vcmp.ne.s32.totalorder %v1026, 0
      %vm1125 = vcmp.ne.s32.totalorder %v1033, 0
      %vm1126 = vcmp.ne.s32.totalorder %v1040, 0
      %vm1127 = vcmp.ne.s32.totalorder %v1047, 0
      %vm1128 = vcmp.ne.s32.totalorder %v1054, 0
      %vm1129 = vcmp.ne.s32.totalorder %v1061, 0
      %vm1130 = vcmp.ne.s32.totalorder %v1068, 0
      %vm1131 = vcmp.ne.s32.totalorder %v1075, 0
      %vm1132 = vcmp.ne.s32.totalorder %v1082, 0
      %vm1133 = vcmp.ne.s32.totalorder %v1089, 0
      %vm1134 = vcmp.ne.s32.totalorder %v1096, 0
      %vm1135 = vcmp.ne.s32.totalorder %v1103, 0
      %vm1136 = vcmp.lt.s32.totalorder %v886, 0
      %vm1137 = vcmp.lt.s32.totalorder %v893, 0
      %vm1138 = vcmp.lt.s32.totalorder %v900, 0
      %vm1139 = vcmp.lt.s32.totalorder %v907, 0
      %vm1140 = vcmp.lt.s32.totalorder %v914, 0
      %vm1141 = vcmp.lt.s32.totalorder %v921, 0
      %vm1142 = vcmp.lt.s32.totalorder %v928, 0
      %vm1143 = vcmp.lt.s32.totalorder %v935, 0
      %vm1144 = vcmp.lt.s32.totalorder %v942, 0
      %vm1145 = vcmp.lt.s32.totalorder %v949, 0
      %vm1146 = vcmp.lt.s32.totalorder %v956, 0
      %vm1147 = vcmp.lt.s32.totalorder %v963, 0
      %vm1148 = vcmp.lt.s32.totalorder %v970, 0
      %vm1149 = vcmp.lt.s32.totalorder %v977, 0
      %vm1150 = vcmp.lt.s32.totalorder %v984, 0
      %vm1151 = vcmp.lt.s32.totalorder %v991, 0
      %vm1152 = vcmp.lt.s32.totalorder %v998, 0
      %vm1153 = vcmp.lt.s32.totalorder %v1005, 0
      %vm1154 = vcmp.lt.s32.totalorder %v1012, 0
      %vm1155 = vcmp.lt.s32.totalorder %v1019, 0
      %vm1156 = vcmp.lt.s32.totalorder %v1026, 0
      %vm1157 = vcmp.lt.s32.totalorder %v1033, 0
      %vm1158 = vcmp.lt.s32.totalorder %v1040, 0
      %vm1159 = vcmp.lt.s32.totalorder %v1047, 0
      %vm1160 = vcmp.lt.s32.totalorder %v1054, 0
      %vm1161 = vcmp.lt.s32.totalorder %v1061, 0
      %vm1162 = vcmp.lt.s32.totalorder %v1068, 0
      %vm1163 = vcmp.lt.s32.totalorder %v1075, 0
      %vm1164 = vcmp.lt.s32.totalorder %v1082, 0
      %vm1165 = vcmp.lt.s32.totalorder %v1089, 0
      %vm1166 = vcmp.lt.s32.totalorder %v1096, 0
      %vm1167 = vcmp.lt.s32.totalorder %v1103, 0
      %vm1168 = vmand %vm1136, %vm1104
      %vm1169 = vmand %vm1137, %vm1105
      %vm1170 = vmand %vm1138, %vm1106
      %vm1171 = vmand %vm1139, %vm1107
      %vm1172 = vmand %vm1140, %vm1108
      %vm1173 = vmand %vm1141, %vm1109
      %vm1174 = vmand %vm1142, %vm1110
      %vm1175 = vmand %vm1143, %vm1111
      %vm1176 = vmand %vm1144, %vm1112
      %vm1177 = vmand %vm1145, %vm1113
      %vm1178 = vmand %vm1146, %vm1114
      %vm1179 = vmand %vm1147, %vm1115
      %vm1180 = vmand %vm1148, %vm1116
      %vm1181 = vmand %vm1149, %vm1117
      %vm1182 = vmand %vm1150, %vm1118
      %vm1183 = vmand %vm1151, %vm1119
      %vm1184 = vmand %vm1152, %vm1120
      %vm1185 = vmand %vm1153, %vm1121
      %vm1186 = vmand %vm1154, %vm1122
      %vm1187 = vmand %vm1155, %vm1123
      %vm1188 = vmand %vm1156, %vm1124
      %vm1189 = vmand %vm1157, %vm1125
      %vm1190 = vmand %vm1158, %vm1126
      %vm1191 = vmand %vm1159, %vm1127
      %vm1192 = vmand %vm1160, %vm1128
      %vm1193 = vmand %vm1161, %vm1129
      %vm1194 = vmand %vm1162, %vm1130
      %vm1195 = vmand %vm1163, %vm1131
      %vm1196 = vmand %vm1164, %vm1132
      %vm1197 = vmand %vm1165, %vm1133
      %vm1198 = vmand %vm1166, %vm1134
      %vm1199 = vmand %vm1167, %vm1135
      %v1200 = vadd.s32 %v886, 8
      %v1201 = vadd.s32 %v893, 8
      %v1202 = vadd.s32 %v900, 8
      %v1203 = vadd.s32 %v907, 8
      %v1204 = vadd.s32 %v914, 8
      %v1205 = vadd.s32 %v921, 8
      %v1206 = vadd.s32 %v928, 8
      %v1207 = vadd.s32 %v935, 8
      %v1208 = vadd.s32 %v942, 8
      %v1209 = vadd.s32 %v949, 8
      %v1210 = vadd.s32 %v956, 8
      %v1211 = vadd.s32 %v963, 8
      %v1212 = vadd.s32 %v970, 8
      %v1213 = vadd.s32 %v977, 8
      %v1214 = vadd.s32 %v984, 8
      %v1215 = vadd.s32 %v991, 8
      %v1216 = vadd.s32 %v998, 8
      %v1217 = vadd.s32 %v1005, 8
      %v1218 = vadd.s32 %v1012, 8
      %v1219 = vadd.s32 %v1019, 8
      %v1220 = vadd.s32 %v1026, 8
      %v1221 = vadd.s32 %v1033, 8
      %v1222 = vadd.s32 %v1040, 8
      %v1223 = vadd.s32 %v1047, 8
      %v1224 = vadd.s32 %v1054, 8
      %v1225 = vadd.s32 %v1061, 8
      %v1226 = vadd.s32 %v1068, 8
      %v1227 = vadd.s32 %v1075, 8
      %v1228 = vadd.s32 %v1082, 8
      %v1229 = vadd.s32 %v1089, 8
      %v1230 = vadd.s32 %v1096, 8
      %v1231 = vadd.s32 %v1103, 8
      %v1232 = vsel %vm1168, %v1200, %v886
      %v1233 = vsel %vm1169, %v1201, %v893
      %v1234 = vsel %vm1170, %v1202, %v900
      %v1235 = vsel %vm1171, %v1203, %v907
      %v1236 = vsel %vm1172, %v1204, %v914
      %v1237 = vsel %vm1173, %v1205, %v921
      %v1238 = vsel %vm1174, %v1206, %v928
      %v1239 = vsel %vm1175, %v1207, %v935
      %v1240 = vsel %vm1176, %v1208, %v942
      %v1241 = vsel %vm1177, %v1209, %v949
      %v1242 = vsel %vm1178, %v1210, %v956
      %v1243 = vsel %vm1179, %v1211, %v963
      %v1244 = vsel %vm1180, %v1212, %v970
      %v1245 = vsel %vm1181, %v1213, %v977
      %v1246 = vsel %vm1182, %v1214, %v984
      %v1247 = vsel %vm1183, %v1215, %v991
      %v1248 = vsel %vm1184, %v1216, %v998
      %v1249 = vsel %vm1185, %v1217, %v1005
      %v1250 = vsel %vm1186, %v1218, %v1012
      %v1251 = vsel %vm1187, %v1219, %v1019
      %v1252 = vsel %vm1188, %v1220, %v1026
      %v1253 = vsel %vm1189, %v1221, %v1033
      %v1254 = vsel %vm1190, %v1222, %v1040
      %v1255 = vsel %vm1191, %v1223, %v1047
      %v1256 = vsel %vm1192, %v1224, %v1054
      %v1257 = vsel %vm1193, %v1225, %v1061
      %v1258 = vsel %vm1194, %v1226, %v1068
      %v1259 = vsel %vm1195, %v1227, %v1075
      %v1260 = vsel %vm1196, %v1228, %v1082
      %v1261 = vsel %vm1197, %v1229, %v1089
      %v1262 = vsel %vm1198, %v1230, %v1096
      %v1263 = vsel %vm1199, %v1231, %v1103
      %vm1264 = vcmp.eq.s32.totalorder %v1232, 0
      %vm1265 = vcmp.eq.s32.totalorder %v1233, 0
      %vm1266 = vcmp.eq.s32.totalorder %v1234, 0
      %vm1267 = vcmp.eq.s32.totalorder %v1235, 0
      %vm1268 = vcmp.eq.s32.totalorder %v1236, 0
      %vm1269 = vcmp.eq.s32.totalorder %v1237, 0
      %vm1270 = vcmp.eq.s32.totalorder %v1238, 0
      %vm1271 = vcmp.eq.s32.totalorder %v1239, 0
      %vm1272 = vcmp.eq.s32.totalorder %v1240, 0
      %vm1273 = vcmp.eq.s32.totalorder %v1241, 0
      %vm1274 = vcmp.eq.s32.totalorder %v1242, 0
      %vm1275 = vcmp.eq.s32.totalorder %v1243, 0
      %vm1276 = vcmp.eq.s32.totalorder %v1244, 0
      %vm1277 = vcmp.eq.s32.totalorder %v1245, 0
      %vm1278 = vcmp.eq.s32.totalorder %v1246, 0
      %vm1279 = vcmp.eq.s32.totalorder %v1247, 0
      %vm1280 = vcmp.eq.s32.totalorder %v1248, 0
      %vm1281 = vcmp.eq.s32.totalorder %v1249, 0
      %vm1282 = vcmp.eq.s32.totalorder %v1250, 0
      %vm1283 = vcmp.eq.s32.totalorder %v1251, 0
      %vm1284 = vcmp.eq.s32.totalorder %v1252, 0
      %vm1285 = vcmp.eq.s32.totalorder %v1253, 0
      %vm1286 = vcmp.eq.s32.totalorder %v1254, 0
      %vm1287 = vcmp.eq.s32.totalorder %v1255, 0
      %vm1288 = vcmp.eq.s32.totalorder %v1256, 0
      %vm1289 = vcmp.eq.s32.totalorder %v1257, 0
      %vm1290 = vcmp.eq.s32.totalorder %v1258, 0
      %vm1291 = vcmp.eq.s32.totalorder %v1259, 0
      %vm1292 = vcmp.eq.s32.totalorder %v1260, 0
      %vm1293 = vcmp.eq.s32.totalorder %v1261, 0
      %vm1294 = vcmp.eq.s32.totalorder %v1262, 0
      %vm1295 = vcmp.eq.s32.totalorder %v1263, 0
      %v1296 = vrot.slane %v784, 7
      %v1297 = vrot.slane %v786, 7
      %v1298 = vrot.slane %v788, 7
      %v1299 = vrot.slane %v790, 7
      %v1300 = vrot.slane %v792, 7
      %v1301 = vrot.slane %v794, 7
      %v1302 = vrot.slane %v796, 7
      %v1303 = vrot.slane %v798, 7
      %v1304 = vrot.slane %v800, 7
      %v1305 = vrot.slane %v802, 7
      %v1306 = vrot.slane %v804, 7
      %v1307 = vrot.slane %v806, 7
      %v1308 = vrot.slane %v808, 7
      %v1309 = vrot.slane %v810, 7
      %v1310 = vrot.slane %v812, 7
      %v1311 = vrot.slane %v814, 7
      %v1312 = vrot.slane %v816, 7
      %v1313 = vrot.slane %v818, 7
      %v1314 = vrot.slane %v820, 7
      %v1315 = vrot.slane %v822, 7
      %v1316 = vrot.slane %v824, 7
      %v1317 = vrot.slane %v826, 7
      %v1318 = vrot.slane %v828, 7
      %v1319 = vrot.slane %v830, 7
      %v1320 = vrot.slane %v832, 7
      %v1321 = vrot.slane %v834, 7
      %v1322 = vrot.slane %v836, 7
      %v1323 = vrot.slane %v838, 7
      %v1324 = vrot.slane %v840, 7
      %v1325 = vrot.slane %v842, 7
      %v1326 = vrot.slane %v844, 7
      %v1327 = vrot.slane %v846, 7
      %vm1328 = vcmp.lt.s32.totalorder %v848, 1
      %v1329 = vsel %vm1328, %v1326, %v1327
      %v1330 = vsel %vm1328, %v1325, %v1326
      %v1331 = vsel %vm1328, %v1324, %v1325
      %v1332 = vsel %vm1328, %v1323, %v1324
      %v1333 = vsel %vm1328, %v1322, %v1323
      %v1334 = vsel %vm1328, %v1321, %v1322
      %v1335 = vsel %vm1328, %v1320, %v1321
      %v1336 = vsel %vm1328, %v1319, %v1320
      %v1337 = vsel %vm1328, %v1318, %v1319
      %v1338 = vsel %vm1328, %v1317, %v1318
      %v1339 = vsel %vm1328, %v1316, %v1317
      %v1340 = vsel %vm1328, %v1315, %v1316
      %v1341 = vsel %vm1328, %v1314, %v1315
      %v1342 = vsel %vm1328, %v1313, %v1314
      %v1343 = vsel %vm1328, %v1312, %v1313
      %v1344 = vsel %vm1328, %v1311, %v1312
      %v1345 = vsel %vm1328, %v1310, %v1311
      %v1346 = vsel %vm1328, %v1309, %v1310
      %v1347 = vsel %vm1328, %v1308, %v1309
      %v1348 = vsel %vm1328, %v1307, %v1308
      %v1349 = vsel %vm1328, %v1306, %v1307
      %v1350 = vsel %vm1328, %v1305, %v1306
      %v1351 = vsel %vm1328, %v1304, %v1305
      %v1352 = vsel %vm1328, %v1303, %v1304
      %v1353 = vsel %vm1328, %v1302, %v1303
      %v1354 = vsel %vm1328, %v1301, %v1302
      %v1355 = vsel %vm1328, %v1300, %v1301
      %v1356 = vsel %vm1328, %v1299, %v1300
      %v1357 = vsel %vm1328, %v1298, %v1299
      %v1358 = vsel %vm1328, %v1297, %v1298
      %v1359 = vsel %vm1328, %v1296, %v1297
      %v1360 = vsel %vm1328, %v1327, %v1296
      %v1361 = vsel %vm1264, 1, 0
      %v1362 = vsel %vm1265, 1, 0
      %v1363 = vsel %vm1266, 1, 0
      %v1364 = vsel %vm1267, 1, 0
      %v1365 = vsel %vm1268, 1, 0
      %v1366 = vsel %vm1269, 1, 0
      %v1367 = vsel %vm1270, 1, 0
      %v1368 = vsel %vm1271, 1, 0
      %v1369 = vsel %vm1272, 1, 0
      %v1370 = vsel %vm1273, 1, 0
      %v1371 = vsel %vm1274, 1, 0
      %v1372 = vsel %vm1275, 1, 0
      %v1373 = vsel %vm1276, 1, 0
      %v1374 = vsel %vm1277, 1, 0
      %v1375 = vsel %vm1278, 1, 0
      %v1376 = vsel %vm1279, 1, 0
      %v1377 = vsel %vm1280, 1, 0
      %v1378 = vsel %vm1281, 1, 0
      %v1379 = vsel %vm1282, 1, 0
      %v1380 = vsel %vm1283, 1, 0
      %v1381 = vsel %vm1284, 1, 0
      %v1382 = vsel %vm1285, 1, 0
      %v1383 = vsel %vm1286, 1, 0
      %v1384 = vsel %vm1287, 1, 0
      %v1385 = vsel %vm1288, 1, 0
      %v1386 = vsel %vm1289, 1, 0
      %v1387 = vsel %vm1290, 1, 0
      %v1388 = vsel %vm1291, 1, 0
      %v1389 = vsel %vm1292, 1, 0
      %v1390 = vsel %vm1293, 1, 0
      %v1391 = vsel %vm1294, 1, 0
      %v1392 = vsel %vm1295, 1, 0
      %vm1393 = vcmp.eq.s32.totalorder %v1361, 1
      %vm1394 = vcmp.eq.s32.totalorder %v1362, 1
      %vm1395 = vcmp.eq.s32.totalorder %v1363, 1
      %vm1396 = vcmp.eq.s32.totalorder %v1364, 1
      %vm1397 = vcmp.eq.s32.totalorder %v1365, 1
      %vm1398 = vcmp.eq.s32.totalorder %v1366, 1
      %vm1399 = vcmp.eq.s32.totalorder %v1367, 1
      %vm1400 = vcmp.eq.s32.totalorder %v1368, 1
      %vm1401 = vcmp.eq.s32.totalorder %v1369, 1
      %vm1402 = vcmp.eq.s32.totalorder %v1370, 1
      %vm1403 = vcmp.eq.s32.totalorder %v1371, 1
      %vm1404 = vcmp.eq.s32.totalorder %v1372, 1
      %vm1405 = vcmp.eq.s32.totalorder %v1373, 1
      %vm1406 = vcmp.eq.s32.totalorder %v1374, 1
      %vm1407 = vcmp.eq.s32.totalorder %v1375, 1
      %vm1408 = vcmp.eq.s32.totalorder %v1376, 1
      %vm1409 = vcmp.eq.s32.totalorder %v1377, 1
      %vm1410 = vcmp.eq.s32.totalorder %v1378, 1
      %vm1411 = vcmp.eq.s32.totalorder %v1379, 1
      %vm1412 = vcmp.eq.s32.totalorder %v1380, 1
      %vm1413 = vcmp.eq.s32.totalorder %v1381, 1
      %vm1414 = vcmp.eq.s32.totalorder %v1382, 1
      %vm1415 = vcmp.eq.s32.totalorder %v1383, 1
      %vm1416 = vcmp.eq.s32.totalorder %v1384, 1
      %vm1417 = vcmp.eq.s32.totalorder %v1385, 1
      %vm1418 = vcmp.eq.s32.totalorder %v1386, 1
      %vm1419 = vcmp.eq.s32.totalorder %v1387, 1
      %vm1420 = vcmp.eq.s32.totalorder %v1388, 1
      %vm1421 = vcmp.eq.s32.totalorder %v1389, 1
      %vm1422 = vcmp.eq.s32.totalorder %v1390, 1
      %vm1423 = vcmp.eq.s32.totalorder %v1391, 1
      %vm1424 = vcmp.eq.s32.totalorder %v1392, 1
      %v1425 = vsel %vm1393, 0.0, %v1360
      %v1426 = vsel %vm1394, 0.0, %v1359
      %v1427 = vsel %vm1395, 0.0, %v1358
      %v1428 = vsel %vm1396, 0.0, %v1357
      %v1429 = vsel %vm1397, 0.0, %v1356
      %v1430 = vsel %vm1398, 0.0, %v1355
      %v1431 = vsel %vm1399, 0.0, %v1354
      %v1432 = vsel %vm1400, 0.0, %v1353
      %v1433 = vsel %vm1401, 0.0, %v1352
      %v1434 = vsel %vm1402, 0.0, %v1351
      %v1435 = vsel %vm1403, 0.0, %v1350
      %v1436 = vsel %vm1404, 0.0, %v1349
      %v1437 = vsel %vm1405, 0.0, %v1348
      %v1438 = vsel %vm1406, 0.0, %v1347
      %v1439 = vsel %vm1407, 0.0, %v1346
      %v1440 = vsel %vm1408, 0.0, %v1345
      %v1441 = vsel %vm1409, 0.0, %v1344
      %v1442 = vsel %vm1410, 0.0, %v1343
      %v1443 = vsel %vm1411, 0.0, %v1342
      %v1444 = vsel %vm1412, 0.0, %v1341
      %v1445 = vsel %vm1413, 0.0, %v1340
      %v1446 = vsel %vm1414, 0.0, %v1339
      %v1447 = vsel %vm1415, 0.0, %v1338
      %v1448 = vsel %vm1416, 0.0, %v1337
      %v1449 = vsel %vm1417, 0.0, %v1336
      %v1450 = vsel %vm1418, 0.0, %v1335
      %v1451 = vsel %vm1419, 0.0, %v1334
      %v1452 = vsel %vm1420, 0.0, %v1333
      %v1453 = vsel %vm1421, 0.0, %v1332
      %v1454 = vsel %vm1422, 0.0, %v1331
      %v1455 = vsel %vm1423, 0.0, %v1330
      %v1456 = vsel %vm1424, 0.0, %v1329
      %v1457 = vmax.f32 %v751, %v784
      %v1458 = vmax.f32 %v752, %v786
      %v1459 = vmax.f32 %v753, %v788
      %v1460 = vmax.f32 %v754, %v790
      %v1461 = vmax.f32 %v755, %v792
      %v1462 = vmax.f32 %v756, %v794
      %v1463 = vmax.f32 %v757, %v796
      %v1464 = vmax.f32 %v758, %v798
      %v1465 = vmax.f32 %v759, %v800
      %v1466 = vmax.f32 %v760, %v802
      %v1467 = vmax.f32 %v761, %v804
      %v1468 = vmax.f32 %v762, %v806
      %v1469 = vmax.f32 %v763, %v808
      %v1470 = vmax.f32 %v764, %v810
      %v1471 = vmax.f32 %v765, %v812
      %v1472 = vmax.f32 %v766, %v814
      %v1473 = vmax.f32 %v767, %v816
      %v1474 = vmax.f32 %v768, %v818
      %v1475 = vmax.f32 %v769, %v820
      %v1476 = vmax.f32 %v770, %v822
      %v1477 = vmax.f32 %v771, %v824
      %v1478 = vmax.f32 %v772, %v826
      %v1479 = vmax.f32 %v773, %v828
      %v1480 = vmax.f32 %v774, %v830
      %v1481 = vmax.f32 %v775, %v832
      %v1482 = vmax.f32 %v776, %v834
      %v1483 = vmax.f32 %v777, %v836
      %v1484 = vmax.f32 %v778, %v838
      %v1485 = vmax.f32 %v779, %v840
      %v1486 = vmax.f32 %v780, %v842
      %v1487 = vmax.f32 %v781, %v844
      %v1488 = vmax.f32 %v782, %v846
      %v1489 = vmax.f32 %v1457, %v1425
      %v1490 = vmax.f32 %v1458, %v1426
      %v1491 = vmax.f32 %v1459, %v1427
      %v1492 = vmax.f32 %v1460, %v1428
      %v1493 = vmax.f32 %v1461, %v1429
      %v1494 = vmax.f32 %v1462, %v1430
      %v1495 = vmax.f32 %v1463, %v1431
      %v1496 = vmax.f32 %v1464, %v1432
      %v1497 = vmax.f32 %v1465, %v1433
      %v1498 = vmax.f32 %v1466, %v1434
      %v1499 = vmax.f32 %v1467, %v1435
      %v1500 = vmax.f32 %v1468, %v1436
      %v1501 = vmax.f32 %v1469, %v1437
      %v1502 = vmax.f32 %v1470, %v1438
      %v1503 = vmax.f32 %v1471, %v1439
      %v1504 = vmax.f32 %v1472, %v1440
      %v1505 = vmax.f32 %v1473, %v1441
      %v1506 = vmax.f32 %v1474, %v1442
      %v1507 = vmax.f32 %v1475, %v1443
      %v1508 = vmax.f32 %v1476, %v1444
      %v1509 = vmax.f32 %v1477, %v1445
      %v1510 = vmax.f32 %v1478, %v1446
      %v1511 = vmax.f32 %v1479, %v1447
      %v1512 = vmax.f32 %v1480, %v1448
      %v1513 = vmax.f32 %v1481, %v1449
      %v1514 = vmax.f32 %v1482, %v1450
      %v1515 = vmax.f32 %v1483, %v1451
      %v1516 = vmax.f32 %v1484, %v1452
      %v1517 = vmax.f32 %v1485, %v1453
      %v1518 = vmax.f32 %v1486, %v1454
      %v1519 = vmax.f32 %v1487, %v1455
      %v1520 = vmax.f32 %v1488, %v1456
      %vm1521 = vcmp.lt.s32.totalorder %v848, 0
      %v1522 = vsub.s32 0, %v848
      %v1523 = vsel %vm1521, %v1522, %v848
      %v1524 = vshrl.u32 %v1523, 6
      %v1525 = vand.u32 %v1523, 63
      %v1526 = vsub.s32 0, %v1525
      %v1527 = vsel %vm1521, %v1526, %v1525
      %vm1528 = vcmp.lt.s32.totalorder %v849, 0
      %v1529 = vsub.s32 0, %v849
      %v1530 = vsel %vm1528, %v1529, %v849
      %v1531 = vshrl.u32 %v1530, 6
      %v1532 = vand.u32 %v1530, 63
      %v1533 = vsub.s32 0, %v1532
      %v1534 = vsel %vm1528, %v1533, %v1532
      %vm1535 = vcmp.lt.s32.totalorder %v850, 0
      %v1536 = vsub.s32 0, %v850
      %v1537 = vsel %vm1535, %v1536, %v850
      %v1538 = vshrl.u32 %v1537, 6
      %v1539 = vand.u32 %v1537, 63
      %v1540 = vsub.s32 0, %v1539
      %v1541 = vsel %vm1535, %v1540, %v1539
      %vm1542 = vcmp.lt.s32.totalorder %v851, 0
      %v1543 = vsub.s32 0, %v851
      %v1544 = vsel %vm1542, %v1543, %v851
      %v1545 = vshrl.u32 %v1544, 6
      %v1546 = vand.u32 %v1544, 63
      %v1547 = vsub.s32 0, %v1546
      %v1548 = vsel %vm1542, %v1547, %v1546
      %vm1549 = vcmp.lt.s32.totalorder %v852, 0
      %v1550 = vsub.s32 0, %v852
      %v1551 = vsel %vm1549, %v1550, %v852
      %v1552 = vshrl.u32 %v1551, 6
      %v1553 = vand.u32 %v1551, 63
      %v1554 = vsub.s32 0, %v1553
      %v1555 = vsel %vm1549, %v1554, %v1553
      %vm1556 = vcmp.lt.s32.totalorder %v853, 0
      %v1557 = vsub.s32 0, %v853
      %v1558 = vsel %vm1556, %v1557, %v853
      %v1559 = vshrl.u32 %v1558, 6
      %v1560 = vand.u32 %v1558, 63
      %v1561 = vsub.s32 0, %v1560
      %v1562 = vsel %vm1556, %v1561, %v1560
      %vm1563 = vcmp.lt.s32.totalorder %v854, 0
      %v1564 = vsub.s32 0, %v854
      %v1565 = vsel %vm1563, %v1564, %v854
      %v1566 = vshrl.u32 %v1565, 6
      %v1567 = vand.u32 %v1565, 63
      %v1568 = vsub.s32 0, %v1567
      %v1569 = vsel %vm1563, %v1568, %v1567
      %vm1570 = vcmp.lt.s32.totalorder %v855, 0
      %v1571 = vsub.s32 0, %v855
      %v1572 = vsel %vm1570, %v1571, %v855
      %v1573 = vshrl.u32 %v1572, 6
      %v1574 = vand.u32 %v1572, 63
      %v1575 = vsub.s32 0, %v1574
      %v1576 = vsel %vm1570, %v1575, %v1574
      %vm1577 = vcmp.lt.s32.totalorder %v856, 0
      %v1578 = vsub.s32 0, %v856
      %v1579 = vsel %vm1577, %v1578, %v856
      %v1580 = vshrl.u32 %v1579, 6
      %v1581 = vand.u32 %v1579, 63
      %v1582 = vsub.s32 0, %v1581
      %v1583 = vsel %vm1577, %v1582, %v1581
      %vm1584 = vcmp.lt.s32.totalorder %v857, 0
      %v1585 = vsub.s32 0, %v857
      %v1586 = vsel %vm1584, %v1585, %v857
      %v1587 = vshrl.u32 %v1586, 6
      %v1588 = vand.u32 %v1586, 63
      %v1589 = vsub.s32 0, %v1588
      %v1590 = vsel %vm1584, %v1589, %v1588
      %vm1591 = vcmp.lt.s32.totalorder %v858, 0
      %v1592 = vsub.s32 0, %v858
      %v1593 = vsel %vm1591, %v1592, %v858
      %v1594 = vshrl.u32 %v1593, 6
      %v1595 = vand.u32 %v1593, 63
      %v1596 = vsub.s32 0, %v1595
      %v1597 = vsel %vm1591, %v1596, %v1595
      %vm1598 = vcmp.lt.s32.totalorder %v859, 0
      %v1599 = vsub.s32 0, %v859
      %v1600 = vsel %vm1598, %v1599, %v859
      %v1601 = vshrl.u32 %v1600, 6
      %v1602 = vand.u32 %v1600, 63
      %v1603 = vsub.s32 0, %v1602
      %v1604 = vsel %vm1598, %v1603, %v1602
      %vm1605 = vcmp.lt.s32.totalorder %v860, 0
      %v1606 = vsub.s32 0, %v860
      %v1607 = vsel %vm1605, %v1606, %v860
      %v1608 = vshrl.u32 %v1607, 6
      %v1609 = vand.u32 %v1607, 63
      %v1610 = vsub.s32 0, %v1609
      %v1611 = vsel %vm1605, %v1610, %v1609
      %vm1612 = vcmp.lt.s32.totalorder %v861, 0
      %v1613 = vsub.s32 0, %v861
      %v1614 = vsel %vm1612, %v1613, %v861
      %v1615 = vshrl.u32 %v1614, 6
      %v1616 = vand.u32 %v1614, 63
      %v1617 = vsub.s32 0, %v1616
      %v1618 = vsel %vm1612, %v1617, %v1616
      %vm1619 = vcmp.lt.s32.totalorder %v862, 0
      %v1620 = vsub.s32 0, %v862
      %v1621 = vsel %vm1619, %v1620, %v862
      %v1622 = vshrl.u32 %v1621, 6
      %v1623 = vand.u32 %v1621, 63
      %v1624 = vsub.s32 0, %v1623
      %v1625 = vsel %vm1619, %v1624, %v1623
      %vm1626 = vcmp.lt.s32.totalorder %v863, 0
      %v1627 = vsub.s32 0, %v863
      %v1628 = vsel %vm1626, %v1627, %v863
      %v1629 = vshrl.u32 %v1628, 6
      %v1630 = vand.u32 %v1628, 63
      %v1631 = vsub.s32 0, %v1630
      %v1632 = vsel %vm1626, %v1631, %v1630
      %vm1633 = vcmp.ne.s32.totalorder %v1527, 0
      %vm1634 = vcmp.ne.s32.totalorder %v1534, 0
      %vm1635 = vcmp.ne.s32.totalorder %v1541, 0
      %vm1636 = vcmp.ne.s32.totalorder %v1548, 0
      %vm1637 = vcmp.ne.s32.totalorder %v1555, 0
      %vm1638 = vcmp.ne.s32.totalorder %v1562, 0
      %vm1639 = vcmp.ne.s32.totalorder %v1569, 0
      %vm1640 = vcmp.ne.s32.totalorder %v1576, 0
      %vm1641 = vcmp.ne.s32.totalorder %v1583, 0
      %vm1642 = vcmp.ne.s32.totalorder %v1590, 0
      %vm1643 = vcmp.ne.s32.totalorder %v1597, 0
      %vm1644 = vcmp.ne.s32.totalorder %v1604, 0
      %vm1645 = vcmp.ne.s32.totalorder %v1611, 0
      %vm1646 = vcmp.ne.s32.totalorder %v1618, 0
      %vm1647 = vcmp.ne.s32.totalorder %v1625, 0
      %vm1648 = vcmp.ne.s32.totalorder %v1632, 0
      %vm1649 = vcmp.lt.s32.totalorder %v1527, 0
      %vm1650 = vcmp.lt.s32.totalorder %v1534, 0
      %vm1651 = vcmp.lt.s32.totalorder %v1541, 0
      %vm1652 = vcmp.lt.s32.totalorder %v1548, 0
      %vm1653 = vcmp.lt.s32.totalorder %v1555, 0
      %vm1654 = vcmp.lt.s32.totalorder %v1562, 0
      %vm1655 = vcmp.lt.s32.totalorder %v1569, 0
      %vm1656 = vcmp.lt.s32.totalorder %v1576, 0
      %vm1657 = vcmp.lt.s32.totalorder %v1583, 0
      %vm1658 = vcmp.lt.s32.totalorder %v1590, 0
      %vm1659 = vcmp.lt.s32.totalorder %v1597, 0
      %vm1660 = vcmp.lt.s32.totalorder %v1604, 0
      %vm1661 = vcmp.lt.s32.totalorder %v1611, 0
      %vm1662 = vcmp.lt.s32.totalorder %v1618, 0
      %vm1663 = vcmp.lt.s32.totalorder %v1625, 0
      %vm1664 = vcmp.lt.s32.totalorder %v1632, 0
      %vm1665 = vmand %vm1649, %vm1633
      %vm1666 = vmand %vm1650, %vm1634
      %vm1667 = vmand %vm1651, %vm1635
      %vm1668 = vmand %vm1652, %vm1636
      %vm1669 = vmand %vm1653, %vm1637
      %vm1670 = vmand %vm1654, %vm1638
      %vm1671 = vmand %vm1655, %vm1639
      %vm1672 = vmand %vm1656, %vm1640
      %vm1673 = vmand %vm1657, %vm1641
      %vm1674 = vmand %vm1658, %vm1642
      %vm1675 = vmand %vm1659, %vm1643
      %vm1676 = vmand %vm1660, %vm1644
      %vm1677 = vmand %vm1661, %vm1645
      %vm1678 = vmand %vm1662, %vm1646
      %vm1679 = vmand %vm1663, %vm1647
      %vm1680 = vmand %vm1664, %vm1648
      %v1681 = vadd.s32 %v1527, 64
      %v1682 = vadd.s32 %v1534, 64
      %v1683 = vadd.s32 %v1541, 64
      %v1684 = vadd.s32 %v1548, 64
      %v1685 = vadd.s32 %v1555, 64
      %v1686 = vadd.s32 %v1562, 64
      %v1687 = vadd.s32 %v1569, 64
      %v1688 = vadd.s32 %v1576, 64
      %v1689 = vadd.s32 %v1583, 64
      %v1690 = vadd.s32 %v1590, 64
      %v1691 = vadd.s32 %v1597, 64
      %v1692 = vadd.s32 %v1604, 64
      %v1693 = vadd.s32 %v1611, 64
      %v1694 = vadd.s32 %v1618, 64
      %v1695 = vadd.s32 %v1625, 64
      %v1696 = vadd.s32 %v1632, 64
      %v1697 = vsel %vm1665, %v1681, %v1527
      %v1698 = vsel %vm1666, %v1682, %v1534
      %v1699 = vsel %vm1667, %v1683, %v1541
      %v1700 = vsel %vm1668, %v1684, %v1548
      %v1701 = vsel %vm1669, %v1685, %v1555
      %v1702 = vsel %vm1670, %v1686, %v1562
      %v1703 = vsel %vm1671, %v1687, %v1569
      %v1704 = vsel %vm1672, %v1688, %v1576
      %v1705 = vsel %vm1673, %v1689, %v1583
      %v1706 = vsel %vm1674, %v1690, %v1590
      %v1707 = vsel %vm1675, %v1691, %v1597
      %v1708 = vsel %vm1676, %v1692, %v1604
      %v1709 = vsel %vm1677, %v1693, %v1611
      %v1710 = vsel %vm1678, %v1694, %v1618
      %v1711 = vsel %vm1679, %v1695, %v1625
      %v1712 = vsel %vm1680, %v1696, %v1632
      %vm1713 = vcmp.lt.s32.totalorder %v1697, 8
      %vm1714 = vcmp.lt.s32.totalorder %v1698, 8
      %vm1715 = vcmp.lt.s32.totalorder %v1699, 8
      %vm1716 = vcmp.lt.s32.totalorder %v1700, 8
      %vm1717 = vcmp.lt.s32.totalorder %v1701, 8
      %vm1718 = vcmp.lt.s32.totalorder %v1702, 8
      %vm1719 = vcmp.lt.s32.totalorder %v1703, 8
      %vm1720 = vcmp.lt.s32.totalorder %v1704, 8
      %vm1721 = vcmp.lt.s32.totalorder %v1705, 8
      %vm1722 = vcmp.lt.s32.totalorder %v1706, 8
      %vm1723 = vcmp.lt.s32.totalorder %v1707, 8
      %vm1724 = vcmp.lt.s32.totalorder %v1708, 8
      %vm1725 = vcmp.lt.s32.totalorder %v1709, 8
      %vm1726 = vcmp.lt.s32.totalorder %v1710, 8
      %vm1727 = vcmp.lt.s32.totalorder %v1711, 8
      %vm1728 = vcmp.lt.s32.totalorder %v1712, 8
      %v1729 = vsel %vm1713, 1, 0
      %v1730 = vsel %vm1714, 1, 0
      %v1731 = vsel %vm1715, 1, 0
      %v1732 = vsel %vm1716, 1, 0
      %v1733 = vsel %vm1717, 1, 0
      %v1734 = vsel %vm1718, 1, 0
      %v1735 = vsel %vm1719, 1, 0
      %v1736 = vsel %vm1720, 1, 0
      %v1737 = vsel %vm1721, 1, 0
      %v1738 = vsel %vm1722, 1, 0
      %v1739 = vsel %vm1723, 1, 0
      %v1740 = vsel %vm1724, 1, 0
      %v1741 = vsel %vm1725, 1, 0
      %v1742 = vsel %vm1726, 1, 0
      %v1743 = vsel %vm1727, 1, 0
      %v1744 = vsel %vm1728, 1, 0
      %vm1745 = vcmp.eq.s32.totalorder %v1729, 1
      %vm1746 = vcmp.eq.s32.totalorder %v1730, 1
      %vm1747 = vcmp.eq.s32.totalorder %v1731, 1
      %vm1748 = vcmp.eq.s32.totalorder %v1732, 1
      %vm1749 = vcmp.eq.s32.totalorder %v1733, 1
      %vm1750 = vcmp.eq.s32.totalorder %v1734, 1
      %vm1751 = vcmp.eq.s32.totalorder %v1735, 1
      %vm1752 = vcmp.eq.s32.totalorder %v1736, 1
      %vm1753 = vcmp.eq.s32.totalorder %v1737, 1
      %vm1754 = vcmp.eq.s32.totalorder %v1738, 1
      %vm1755 = vcmp.eq.s32.totalorder %v1739, 1
      %vm1756 = vcmp.eq.s32.totalorder %v1740, 1
      %vm1757 = vcmp.eq.s32.totalorder %v1741, 1
      %vm1758 = vcmp.eq.s32.totalorder %v1742, 1
      %vm1759 = vcmp.eq.s32.totalorder %v1743, 1
      %vm1760 = vcmp.eq.s32.totalorder %v1744, 1
      %v1761 = vsel %vm1745, 0.0, %v1520
      %v1762 = vsel %vm1746, 0.0, %v1505
      %v1763 = vsel %vm1747, 0.0, %v1506
      %v1764 = vsel %vm1748, 0.0, %v1507
      %v1765 = vsel %vm1749, 0.0, %v1508
      %v1766 = vsel %vm1750, 0.0, %v1509
      %v1767 = vsel %vm1751, 0.0, %v1510
      %v1768 = vsel %vm1752, 0.0, %v1511
      %v1769 = vsel %vm1753, 0.0, %v1512
      %v1770 = vsel %vm1754, 0.0, %v1513
      %v1771 = vsel %vm1755, 0.0, %v1514
      %v1772 = vsel %vm1756, 0.0, %v1515
      %v1773 = vsel %vm1757, 0.0, %v1516
      %v1774 = vsel %vm1758, 0.0, %v1517
      %v1775 = vsel %vm1759, 0.0, %v1518
      %v1776 = vsel %vm1760, 0.0, %v1519
      %v1777 = vmax.f32 %v1489, %v1505
      %v1778 = vmax.f32 %v1490, %v1506
      %v1779 = vmax.f32 %v1491, %v1507
      %v1780 = vmax.f32 %v1492, %v1508
      %v1781 = vmax.f32 %v1493, %v1509
      %v1782 = vmax.f32 %v1494, %v1510
      %v1783 = vmax.f32 %v1495, %v1511
      %v1784 = vmax.f32 %v1496, %v1512
      %v1785 = vmax.f32 %v1497, %v1513
      %v1786 = vmax.f32 %v1498, %v1514
      %v1787 = vmax.f32 %v1499, %v1515
      %v1788 = vmax.f32 %v1500, %v1516
      %v1789 = vmax.f32 %v1501, %v1517
      %v1790 = vmax.f32 %v1502, %v1518
      %v1791 = vmax.f32 %v1503, %v1519
      %v1792 = vmax.f32 %v1504, %v1520
      %v1793 = vmax.f32 %v1777, %v1761
      %v1794 = vmax.f32 %v1778, %v1762
      %v1795 = vmax.f32 %v1779, %v1763
      %v1796 = vmax.f32 %v1780, %v1764
      %v1797 = vmax.f32 %v1781, %v1765
      %v1798 = vmax.f32 %v1782, %v1766
      %v1799 = vmax.f32 %v1783, %v1767
      %v1800 = vmax.f32 %v1784, %v1768
      %v1801 = vmax.f32 %v1785, %v1769
      %v1802 = vmax.f32 %v1786, %v1770
      %v1803 = vmax.f32 %v1787, %v1771
      %v1804 = vmax.f32 %v1788, %v1772
      %v1805 = vmax.f32 %v1789, %v1773
      %v1806 = vmax.f32 %v1790, %v1774
      %v1807 = vmax.f32 %v1791, %v1775
      %v1808 = vmax.f32 %v1792, %v1776
      %v1809 = vpack.c.bf16 %v1793, %v1793
      %v1810 = vpack.c.bf16 %v1794, %v1794
      %v1811 = vpack.c.bf16 %v1795, %v1795
      %v1812 = vpack.c.bf16 %v1796, %v1796
      %v1813 = vpack.c.bf16 %v1797, %v1797
      %v1814 = vpack.c.bf16 %v1798, %v1798
      %v1815 = vpack.c.bf16 %v1799, %v1799
      %v1816 = vpack.c.bf16 %v1800, %v1800
      %v1817 = vpack.c.bf16 %v1801, %v1801
      %v1818 = vpack.c.bf16 %v1802, %v1802
      %v1819 = vpack.c.bf16 %v1803, %v1803
      %v1820 = vpack.c.bf16 %v1804, %v1804
      %v1821 = vpack.c.bf16 %v1805, %v1805
      %v1822 = vpack.c.bf16 %v1806, %v1806
      %v1823 = vpack.c.bf16 %v1807, %v1807
      %v1824 = vpack.c.bf16 %v1808, %v1808
      %1825 = vst [vmem:[%s240] sm:$0xf] %v1809
      %1826 = vst [vmem:[%s240 + $0x4] sm:$0xf] %v1810
      %1827 = vst [vmem:[%s240 + $0x8] sm:$0xf] %v1811
      %1828 = vst [vmem:[%s240 + $0xc] sm:$0xf] %v1812
      %1829 = vst [vmem:[%s240 + $0x10] sm:$0xf] %v1813
      %1830 = vst [vmem:[%s240 + $0x14] sm:$0xf] %v1814
      %1831 = vst [vmem:[%s240 + $0x18] sm:$0xf] %v1815
      %1832 = vst [vmem:[%s240 + $0x1c] sm:$0xf] %v1816
      %1833 = vst [vmem:[%s240 + $0x20] sm:$0xf] %v1817
      %1834 = vst [vmem:[%s240 + $0x24] sm:$0xf] %v1818
      %1835 = vst [vmem:[%s240 + $0x28] sm:$0xf] %v1819
      %1836 = vst [vmem:[%s240 + $0x2c] sm:$0xf] %v1820
      %1837 = vst [vmem:[%s240 + $0x30] sm:$0xf] %v1821
      %1838 = vst [vmem:[%s240 + $0x34] sm:$0xf] %v1822
      %1839 = vst [vmem:[%s240 + $0x38] sm:$0xf] %v1823
      %1840 = vst [vmem:[%s240 + $0x3c] sm:$0xf] %v1824
      %p1841 = scmp.lt.s32.totalorder %s18, 1
      %s1842 = scalar_select %p1841, %s18, 1
      %p1843 = scmp.lt.s32.totalorder %s19, 0
      %s1844 = scalar_select %p1843, %s19, 0
      %s1845 = smul.addr %s1844, 16
      %s1846 = smul.addr %s1842, 16
      %s1847 = sadd.s32 %s1845, %s1846
      %s1848 = smul.addr %s1847, 4
      %s1849 = scalar_lea.vmem %s3, %s1848
      // Predicated region
      $region33: #{_lambda_.1} parent=31 // pred_check
        %p1850 = pneg %p126
      $region34: #{_lambda_.1} parent=31 // pred_check_branch
        %1852 = sbr.rel (%p1850) target = $region36
      $region35: #{_lambda_.1} parent=31 // pred_region
        _
      $region36: #{_lambda_.1} parent=31 // pred_fallthru
        _
    $region32: #{_lambda_.1} parent=5 // pred_fallthru
      _
    %p1853 = scmp.le.s32.totalorder 2, %s9
    // Predicated region
    $region37: #{_lambda_.1} parent=5 // pred_check
      %p1854 = pneg %p1853
    $region38: #{_lambda_.1} parent=5 // pred_check_branch
      %1856 = sbr.rel (%p1854) target = $region40
    $region39: #{_lambda_.1} parent=5 // pred_region
      %s1857 = ssub.s32 %s9, 2
      // Predicated region
      $region41: #{_lambda_.1} parent=39 // pred_check
        %p1858 = pneg %p132
      $region42: #{_lambda_.1} parent=39 // pred_check_branch
        %1860 = sbr.rel (%p1858) target = $region44
      $region43: #{_lambda_.1} parent=39 // pred_region
        %p1861 = scmp.lt.s32.totalorder %s20, 1
        %s1862 = scalar_select %p1861, %s20, 1
        %p1863 = scmp.lt.s32.totalorder %s21, 0
        %s1864 = scalar_select %p1863, %s21, 0
        %s1865 = smul.addr %s1864, 16
        %s1866 = smul.addr %s1862, 16
        %s1867 = sadd.s32 %s1865, %s1866
        %s1868 = smul.addr %s1867, 4
        %s1869 = scalar_lea.vmem %s3, %s1868
      $region44: #{_lambda_.1} parent=39 // pred_fallthru
        _
    $region40: #{_lambda_.1} parent=5 // pred_fallthru
      _
  $region6: #{_lambda_.1} parent=0 // loop_footer
    %s13 = sadd.s32 1, %s9
  $region7: #{_lambda_.1} parent=0 // loop_footer_branch
    %8 = sbr.rel target = $region3
  $region8: #{_lambda_.1} parent=0 // loop_exit
    _

</llo_original>
